<compile_context>
chip_gen: v5e
topology: v5e:2x2
jax: 0.10.0
libtpu: 0.0.40
codegen_flags: <defaults>
</compile_context>

<pallas_src>
import functools

import jax
import jax.numpy as jnp
from jax.experimental import pallas as pl
from jax.experimental.pallas import tpu as pltpu


# --------------------------------------------------------------------------
# Config (small synthetic shapes)
# --------------------------------------------------------------------------
CONFIG = dict(
    vocab_size=64,
    seq_length=16,   # max positions (wpe rows)
    n_embd=32,
    n_head=4,
    n_layer=2,
    dropout=0.0,
)

# Row layout of the packed per-layer vector operand `vecs` (L+1, 16, D).
R_LN1W, R_LN1B, R_BQ, R_BK, R_BV, R_BATT, R_LN2W, R_LN2B, R_BPROJ = range(9)
VEC_ROWS = 16            # padded row count (sublane-tile friendly)


# --------------------------------------------------------------------------
# In-kernel helpers
# --------------------------------------------------------------------------
def _layernorm(h, w, b, eps=1e-5):
    mu = jnp.mean(h, axis=-1, keepdims=True)
    var = jnp.mean((h - mu) ** 2, axis=-1, keepdims=True)
    return (h - mu) * jax.lax.rsqrt(var + eps) * w + b


def _gelu(x):
    # GPT-2 tanh-approximate GELU (EUP-friendly; avoids erf lowering).
    c = 0.7978845608028654  # sqrt(2/pi)
    return 0.5 * x * (1.0 + jnp.tanh(c * (x + 0.044715 * x * x * x)))


# --------------------------------------------------------------------------
# Single fused Pallas kernel: all blocks + final LN + tied lm_head
# --------------------------------------------------------------------------
def gpt_kernel(tok_ref, pe_ref, vecs_ref, bfc_ref,
               wqkv_ref, wattn_ref, wfc_ref, wproj_ref, wte_t_ref,
               logits_ref, *, n_head):
    B, T, D = tok_ref.shape
    n_layer = wqkv_ref.shape[0]
    hd = D // n_head
    N = B * T
    scale = 1.0 / (hd ** 0.5)
    bf16 = jnp.bfloat16
    f32 = jnp.float32

    # Embeddings: token (gathered outside) + positional (already sliced to T).
    x = (tok_ref[...].astype(f32) + pe_ref[...][None, :, :]).reshape(N, D)

    # Additive causal bias, built and broadcast to (B,T,T) exactly once.
    row = jax.lax.broadcasted_iota(jnp.int32, (T, T), 0)
    col = jax.lax.broadcasted_iota(jnp.int32, (T, T), 1)
    causal = jnp.broadcast_to(
        jnp.where(col <= row, 0.0, -1e30).astype(f32)[None], (B, T, T))

    def vrow(li, r):
        return vecs_ref[li, r:r + 1, :]          # (1, D), broadcasts over rows

    for li in range(n_layer):                    # static unroll over layers
        # ---- attention branch ------------------------------------------------
        h = _layernorm(x, vrow(li, R_LN1W), vrow(li, R_LN1B))
        qkv = jnp.dot(h.astype(bf16), wqkv_ref[li],
                      preferred_element_type=f32)                       # (N, 3D)
        q = ((qkv[:, :D] + vrow(li, R_BQ)) * scale).reshape(B, T, D)
        k = (qkv[:, D:2 * D] + vrow(li, R_BK)).reshape(B, T, D)
        v = (qkv[:, 2 * D:] + vrow(li, R_BV)).reshape(B, T, D)

        ctx = []
        for hi in range(n_head):                 # small unrolled head loop
            sl = slice(hi * hd, (hi + 1) * hd)
            s = jnp.einsum('bqd,bkd->bqk', q[..., sl], k[..., sl],
                           preferred_element_type=f32) + causal          # (B,T,T)
            s = s - jnp.max(s, axis=-1, keepdims=True)
            p = jnp.exp(s)
            p = p * pl.reciprocal(jnp.sum(p, axis=-1, keepdims=True), approx=True)
            ctx.append(jnp.einsum('bqk,bkd->bqd', p, v[..., sl],
                                  preferred_element_type=f32))           # (B,T,hd)

        # One output projection for all heads (lane concat, single MXU dot).
        ctx_all = jnp.concatenate(ctx, axis=-1).reshape(N, D)
        att = jnp.dot(ctx_all.astype(bf16), wattn_ref[li],
                      preferred_element_type=f32) + vrow(li, R_BATT)
        x = x + att

        # ---- MLP branch ------------------------------------------------------
        h2 = _layernorm(x, vrow(li, R_LN2W), vrow(li, R_LN2B))
        ff = jnp.dot(h2.astype(bf16), wfc_ref[li],
                     preferred_element_type=f32) + bfc_ref[li:li + 1, :]
        ff = _gelu(ff)
        x = x + jnp.dot(ff.astype(bf16), wproj_ref[li],
                        preferred_element_type=f32) + vrow(li, R_BPROJ)

    # ---- final LayerNorm + tied lm_head on the last position only ------------
    xl = x.reshape(B, T, D)[:, T - 1, :]                                  # (B, D)
    xl = _layernorm(xl, vecs_ref[n_layer, 0:1, :], vecs_ref[n_layer, 1:2, :])
    logits_ref[...] = jnp.dot(xl.astype(bf16), wte_t_ref[...],
                              preferred_element_type=f32).astype(logits_ref.dtype)


# --------------------------------------------------------------------------
# Wrapper: one pallas_call for the whole forward
# --------------------------------------------------------------------------
def gpt_forward(idx, weights, config):
    """Equivalent of GPT.forward(idx, targets=None) -> (logits[B,1,V], None)."""
    B, T = idx.shape
    V = weights["wte"].shape[0]
    V_pad = weights["wte_t"].shape[1]

    # Data-dependent embedding gather stays in XLA; everything else is fused.
    tok = jnp.take(weights["wte"], idx, axis=0)          # (B, T, D) f32
    pe = weights["wpe"][:T]                              # (T, D): slice off hot path

    operands = (tok, pe, weights["vecs"], weights["bfc"],
                weights["wqkv"], weights["wattn"], weights["wfc"],
                weights["wproj"], weights["wte_t"])

    logits_pad = pl.pallas_call(
        functools.partial(gpt_kernel, n_head=config["n_head"]),
        out_shape=jax.ShapeDtypeStruct((B, V_pad), jnp.float32),
        in_specs=[pl.BlockSpec(memory_space=pltpu.MemorySpace.VMEM)
                  for _ in operands],
        out_specs=pl.BlockSpec(memory_space=pltpu.MemorySpace.VMEM),
        compiler_params=pltpu.CompilerParams(
            vmem_limit_bytes=32 * 1024 * 1024),
    )(*operands)
    return logits_pad[:, :V][:, None, :], None           # (B, 1, V)


# --------------------------------------------------------------------------
# Deterministic parameter init (packed per-layer vectors; bf16 matmul weights;
# wte^T precomputed, lane-padded to 128)
# --------------------------------------------------------------------------
def init_weights(key, config):
    V, P, D, L = (config["vocab_size"], config["seq_length"],
                  config["n_embd"], config["n_layer"])
    V_pad = ((V + 127) // 128) * 128
    keys = iter(jax.random.split(key, 24))

    def nrm(shape, scale=0.02):
        return (scale * jax.random.normal(next(keys), shape)).astype(jnp.float32)

    wte = nrm((V, D))                                    # tied with lm_head
    wpe = nrm((P, D))

    wqkv = nrm((L, D, 3 * D));   bqkv = nrm((L, 3 * D))
    wattn = nrm((L, D, D));      battn = nrm((L, D))
    wfc = nrm((L, D, 4 * D));    bfc = nrm((L, 4 * D))
    wproj = nrm((L, 4 * D, D));  bproj = nrm((L, D))
    ln1w = 1.0 + nrm((L, D));    ln1b = nrm((L, D))
    ln2w = 1.0 + nrm((L, D));    ln2b = nrm((L, D))
    lnfw = 1.0 + nrm((D,));      lnfb = nrm((D,))

    # Pack the tiny per-layer vectors into one stacked operand (L+1, 16, D):
    # rows 0..8 per layer (see R_* constants); layer index L holds final LN.
    layer_rows = jnp.stack(
        [ln1w, ln1b, bqkv[:, :D], bqkv[:, D:2 * D], bqkv[:, 2 * D:],
         battn, ln2w, ln2b, bproj], axis=1)              # (L, 9, D)
    layer_rows = jnp.pad(layer_rows, ((0, 0), (0, VEC_ROWS - 9), (0, 0)))
    final_rows = jnp.zeros((1, VEC_ROWS, D), jnp.float32)
    final_rows = final_rows.at[0, 0].set(lnfw).at[0, 1].set(lnfb)
    vecs = jnp.concatenate([layer_rows, final_rows], axis=0)

    # Tied lm_head: transpose once and lane-pad to 128 (zero columns sliced off
    # in the wrapper).  NOTE: derived from wte at init -> weight tie must be
    # re-materialized if wte is ever updated (inference-only today).
    wte_t = (jnp.zeros((D, V_pad), jnp.float32).at[:, :V].set(wte.T)
             ).astype(jnp.bfloat16)

    bf = jnp.bfloat16
    return dict(wte=wte, wpe=wpe, vecs=vecs, bfc=bfc,
                wqkv=wqkv.astype(bf), wattn=wattn.astype(bf),
                wfc=wfc.astype(bf), wproj=wproj.astype(bf),
                wte_t=wte_t)


# --------------------------------------------------------------------------
# Pure-JAX reference (same math: bf16 matmul inputs, f32 accumulate, f32
# LayerNorm/softmax) for a correctness check
# --------------------------------------------------------------------------
def gpt_forward_ref(idx, weights, config):
    B, T = idx.shape
    D, H, L, V = (config["n_embd"], config["n_head"],
                  config["n_layer"], config["vocab_size"])
    hd = D // H
    wte, wpe, vecs, bfc = (weights["wte"], weights["wpe"],
                           weights["vecs"], weights["bfc"])
    wqkv, wattn, wfc, wproj, wte_t = (weights["wqkv"], weights["wattn"],
                                      weights["wfc"], weights["wproj"],
                                      weights["wte_t"])

    def mm(a, w):  # bf16 inputs, f32 accumulation (mirrors the kernel)
        return jnp.einsum('...d,df->...f', a.astype(jnp.bfloat16), w,
                          preferred_element_type=jnp.float32)

    def ln(h, w, b):
        mu = jnp.mean(h, -1, keepdims=True)
        var = jnp.mean((h - mu) ** 2, -1, keepdims=True)
        return (h - mu) * jax.lax.rsqrt(var + 1e-5) * w + b

    x = jnp.take(wte, idx, axis=0) + wpe[:T][None]
    mask = jnp.tril(jnp.ones((T, T), bool))
    for li in range(L):
        r = vecs[li]
        h = ln(x, r[R_LN1W], r[R_LN1B])
        qkv = mm(h, wqkv[li]) + jnp.concatenate([r[R_BQ], r[R_BK], r[R_BV]])
        q, k, v = jnp.split(qkv, 3, axis=-1)
        q = q.reshape(B, T, H, hd).transpose(0, 2, 1, 3)
        k = k.reshape(B, T, H, hd).transpose(0, 2, 1, 3)
        v = v.reshape(B, T, H, hd).transpose(0, 2, 1, 3)
        s = jnp.einsum("bhqd,bhkd->bhqk", q, k) / (hd ** 0.5)
        s = jnp.where(mask, s, -jnp.inf)
        p = jax.nn.softmax(s, axis=-1)
        a = jnp.einsum("bhqk,bhkd->bhqd", p, v).transpose(0, 2, 1, 3).reshape(B, T, D)
        x = x + mm(a, wattn[li]) + r[R_BATT]
        h2 = ln(x, r[R_LN2W], r[R_LN2B])
        ff = mm(h2, wfc[li]) + bfc[li]
        c = 0.7978845608028654
        ff = 0.5 * ff * (1.0 + jnp.tanh(c * (ff + 0.044715 * ff ** 3)))
        x = x + mm(ff, wproj[li]) + r[R_BPROJ]

    xl = ln(x[:, -1, :], vecs[L, 0], vecs[L, 1])
    return mm(xl, wte_t)[:, :V][:, None, :]


# --------------------------------------------------------------------------
# Main
# --------------------------------------------------------------------------
if __name__ == "__main__":
    key = jax.random.PRNGKey(0)
    k_w, k_idx = jax.random.split(key)

    weights = init_weights(k_w, CONFIG)

    B, T = 2, 8
    idx = jax.random.randint(k_idx, (B, T), 0, CONFIG["vocab_size"], dtype=jnp.int32)

    fwd = jax.jit(lambda i, w: gpt_forward(i, w, CONFIG))
    logits, loss = fwd(idx, weights)
    logits = jax.block_until_ready(logits)

    assert logits.shape == (B, 1, CONFIG["vocab_size"])
    assert loss is None

    ref = gpt_forward_ref(idx, weights, CONFIG)
    # approx=True softmax reciprocal introduces ~1e-3-level relative noise
    assert jnp.allclose(logits, ref, rtol=5e-3, atol=5e-3), "mismatch vs reference"

    print("KERNEL_OK")
</pallas_src>

<mosaic_0001>
module attributes {stable_mosaic.version = 11 : i64} {
  func.func @gpt_kernel(%arg0: memref<2x8x32xf32, #tpu.memory_space<vmem>>, %arg1: memref<8x32xf32, #tpu.memory_space<vmem>>, %arg2: memref<3x16x32xf32, #tpu.memory_space<vmem>>, %arg3: memref<2x128xf32, #tpu.memory_space<vmem>>, %arg4: memref<2x32x96xbf16, #tpu.memory_space<vmem>>, %arg5: memref<2x32x32xbf16, #tpu.memory_space<vmem>>, %arg6: memref<2x32x128xbf16, #tpu.memory_space<vmem>>, %arg7: memref<2x128x32xbf16, #tpu.memory_space<vmem>>, %arg8: memref<32x128xbf16, #tpu.memory_space<vmem>>, %arg9: memref<2x128xf32, #tpu.memory_space<vmem>>) attributes {dimension_semantics = [], scalar_prefetch = 0 : i64, scratch_operands = 0 : i64, tpu.core_type = #tpu.core_type<tc>} {
    %c0 = arith.constant 0 : index
    %c0_0 = arith.constant 0 : index
    %c0_1 = arith.constant 0 : index
    %0 = vector.load %arg0[%c0, %c0_0, %c0_1] : memref<2x8x32xf32, #tpu.memory_space<vmem>>, vector<2x8x32xf32>
    %c0_2 = arith.constant 0 : index
    %c0_3 = arith.constant 0 : index
    %1 = vector.load %arg1[%c0_2, %c0_3] : memref<8x32xf32, #tpu.memory_space<vmem>>, vector<8x32xf32>
    %2 = vector.shape_cast %1 : vector<8x32xf32> to vector<1x8x32xf32>
    %3 = vector.broadcast %2 : vector<1x8x32xf32> to vector<2x8x32xf32>
    %4 = arith.addf %0, %3 : vector<2x8x32xf32>
    %5 = vector.shape_cast %4 : vector<2x8x32xf32> to vector<16x32xf32>
    %6 = tpu.iota {dimensions = array<i32: 0>} : vector<8x8xi32>
    %7 = tpu.iota {dimensions = array<i32: 1>} : vector<8x8xi32>
    %8 = arith.cmpi sle, %7, %6 : vector<8x8xi32>
    %cst = arith.constant 0.000000e+00 : f32
    %cst_4 = arith.constant -1.000000e+30 : f32
    %9 = vector.broadcast %cst : f32 to vector<8x8xf32>
    %10 = vector.broadcast %cst_4 : f32 to vector<8x8xf32>
    %11 = arith.select %8, %9, %10 : vector<8x8xi1>, vector<8x8xf32>
    %12 = vector.shape_cast %11 : vector<8x8xf32> to vector<1x8x8xf32>
    %13 = vector.shape_cast %12 : vector<1x8x8xf32> to vector<1x8x8xf32>
    %14 = vector.broadcast %13 : vector<1x8x8xf32> to vector<2x8x8xf32>
    %c0_5 = arith.constant 0 : index
    %c0_6 = arith.constant 0 : index
    %c0_7 = arith.constant 0 : index
    %15 = vector.load %arg2[%c0_5, %c0_6, %c0_7] : memref<3x16x32xf32, #tpu.memory_space<vmem>>, vector<1x1x32xf32>
    %16 = vector.shape_cast %15 : vector<1x1x32xf32> to vector<1x32xf32>
    %c0_8 = arith.constant 0 : index
    %c1 = arith.constant 1 : index
    %c0_9 = arith.constant 0 : index
    %17 = vector.load %arg2[%c0_8, %c1, %c0_9] : memref<3x16x32xf32, #tpu.memory_space<vmem>>, vector<1x1x32xf32>
    %18 = vector.shape_cast %17 : vector<1x1x32xf32> to vector<1x32xf32>
    %cst_10 = arith.constant dense<0.000000e+00> : vector<16xf32>
    %19 = vector.multi_reduction <add>, %5, %cst_10 [1] : vector<16x32xf32> to vector<16xf32>
    %20 = vector.shape_cast %19 : vector<16xf32> to vector<16x1xf32>
    %cst_11 = arith.constant 3.200000e+01 : f32
    %21 = vector.broadcast %cst_11 : f32 to vector<16x1xf32>
    %22 = arith.divf %20, %21 : vector<16x1xf32>
    %23 = vector.broadcast %22 : vector<16x1xf32> to vector<16x32xf32>
    %24 = arith.subf %5, %23 : vector<16x32xf32>
    %25 = arith.mulf %24, %24 : vector<16x32xf32>
    %cst_12 = arith.constant dense<0.000000e+00> : vector<16xf32>
    %26 = vector.multi_reduction <add>, %25, %cst_12 [1] : vector<16x32xf32> to vector<16xf32>
    %27 = vector.shape_cast %26 : vector<16xf32> to vector<16x1xf32>
    %cst_13 = arith.constant 3.200000e+01 : f32
    %28 = vector.broadcast %cst_13 : f32 to vector<16x1xf32>
    %29 = arith.divf %27, %28 : vector<16x1xf32>
    %30 = vector.broadcast %22 : vector<16x1xf32> to vector<16x32xf32>
    %31 = arith.subf %5, %30 : vector<16x32xf32>
    %cst_14 = arith.constant 9.99999974E-6 : f32
    %32 = vector.broadcast %cst_14 : f32 to vector<16x1xf32>
    %33 = arith.addf %29, %32 : vector<16x1xf32>
    %34 = math.rsqrt %33 : vector<16x1xf32>
    %35 = vector.broadcast %34 : vector<16x1xf32> to vector<16x32xf32>
    %36 = arith.mulf %31, %35 : vector<16x32xf32>
    %37 = vector.broadcast %16 : vector<1x32xf32> to vector<16x32xf32>
    %38 = arith.mulf %36, %37 : vector<16x32xf32>
    %39 = vector.broadcast %18 : vector<1x32xf32> to vector<16x32xf32>
    %40 = arith.addf %38, %39 : vector<16x32xf32>
    %41 = arith.truncf %40 : vector<16x32xf32> to vector<16x32xbf16>
    %c0_15 = arith.constant 0 : index
    %c0_16 = arith.constant 0 : index
    %c0_17 = arith.constant 0 : index
    %42 = vector.load %arg4[%c0_15, %c0_16, %c0_17] : memref<2x32x96xbf16, #tpu.memory_space<vmem>>, vector<1x32x96xbf16>
    %43 = vector.shape_cast %42 : vector<1x32x96xbf16> to vector<32x96xbf16>
    %cst_18 = arith.constant dense<0.000000e+00> : vector<16x96xf32>
    %44 = tpu.matmul %41, %43, %cst_18 {dimension_numbers = #tpu.dot_dimension_numbers<[1], [0], [0], [1], [0, 0, 1, 1], [], []>} : vector<16x32xbf16>, vector<32x96xbf16>, vector<16x96xf32> -> vector<16x96xf32>
    %45 = vector.extract_strided_slice %44 {offsets = [0, 0], sizes = [16, 32], strides = [1, 1]} : vector<16x96xf32> to vector<16x32xf32>
    %c0_19 = arith.constant 0 : index
    %c2 = arith.constant 2 : index
    %c0_20 = arith.constant 0 : index
    %46 = vector.load %arg2[%c0_19, %c2, %c0_20] : memref<3x16x32xf32, #tpu.memory_space<vmem>>, vector<1x1x32xf32>
    %47 = vector.shape_cast %46 : vector<1x1x32xf32> to vector<1x32xf32>
    %48 = vector.broadcast %47 : vector<1x32xf32> to vector<16x32xf32>
    %49 = arith.addf %45, %48 : vector<16x32xf32>
    %cst_21 = arith.constant 0.353553385 : f32
    %50 = vector.broadcast %cst_21 : f32 to vector<16x32xf32>
    %51 = arith.mulf %49, %50 : vector<16x32xf32>
    %52 = vector.shape_cast %51 : vector<16x32xf32> to vector<2x8x32xf32>
    %53 = vector.extract_strided_slice %44 {offsets = [0, 32], sizes = [16, 32], strides = [1, 1]} : vector<16x96xf32> to vector<16x32xf32>
    %c0_22 = arith.constant 0 : index
    %c3 = arith.constant 3 : index
    %c0_23 = arith.constant 0 : index
    %54 = vector.load %arg2[%c0_22, %c3, %c0_23] : memref<3x16x32xf32, #tpu.memory_space<vmem>>, vector<1x1x32xf32>
    %55 = vector.shape_cast %54 : vector<1x1x32xf32> to vector<1x32xf32>
    %56 = vector.broadcast %55 : vector<1x32xf32> to vector<16x32xf32>
    %57 = arith.addf %53, %56 : vector<16x32xf32>
    %58 = vector.shape_cast %57 : vector<16x32xf32> to vector<2x8x32xf32>
    %59 = vector.extract_strided_slice %44 {offsets = [0, 64], sizes = [16, 32], strides = [1, 1]} : vector<16x96xf32> to vector<16x32xf32>
    %c0_24 = arith.constant 0 : index
    %c4 = arith.constant 4 : index
    %c0_25 = arith.constant 0 : index
    %60 = vector.load %arg2[%c0_24, %c4, %c0_25] : memref<3x16x32xf32, #tpu.memory_space<vmem>>, vector<1x1x32xf32>
    %61 = vector.shape_cast %60 : vector<1x1x32xf32> to vector<1x32xf32>
    %62 = vector.broadcast %61 : vector<1x32xf32> to vector<16x32xf32>
    %63 = arith.addf %59, %62 : vector<16x32xf32>
    %64 = vector.shape_cast %63 : vector<16x32xf32> to vector<2x8x32xf32>
    %65 = vector.extract_strided_slice %52 {offsets = [0, 0, 0], sizes = [2, 8, 8], strides = [1, 1, 1]} : vector<2x8x32xf32> to vector<2x8x8xf32>
    %66 = vector.extract_strided_slice %58 {offsets = [0, 0, 0], sizes = [2, 8, 8], strides = [1, 1, 1]} : vector<2x8x32xf32> to vector<2x8x8xf32>
    "tpu.trace_start"() <{level = 10 : i32, message = "bqd,bkd->bqk"}> : () -> ()
    %cst_26 = arith.constant dense<0.000000e+00> : vector<2x8x8xf32>
    %67 = tpu.matmul %65, %66, %cst_26 {dimension_numbers = #tpu.dot_dimension_numbers<[2], [2], [1], [1], [0, 0, 0, 1, 1, 1], [0], [0]>} : vector<2x8x8xf32>, vector<2x8x8xf32>, vector<2x8x8xf32> -> vector<2x8x8xf32>
    "tpu.trace_stop"() : () -> ()
    %68 = arith.addf %67, %14 : vector<2x8x8xf32>
    %cst_27 = arith.constant dense<0xFF800000> : vector<2x8xf32>
    %69 = vector.multi_reduction <maximumf>, %68, %cst_27 [2] : vector<2x8x8xf32> to vector<2x8xf32>
    %70 = vector.shape_cast %69 : vector<2x8xf32> to vector<2x8x1xf32>
    %71 = vector.broadcast %70 : vector<2x8x1xf32> to vector<2x8x8xf32>
    %72 = arith.subf %68, %71 : vector<2x8x8xf32>
    %73 = math.exp %72 : vector<2x8x8xf32>
    %cst_28 = arith.constant dense<0.000000e+00> : vector<2x8xf32>
    %74 = vector.multi_reduction <add>, %73, %cst_28 [2] : vector<2x8x8xf32> to vector<2x8xf32>
    %75 = vector.shape_cast %74 : vector<2x8xf32> to vector<2x8x1xf32>
    %76 = tpu.reciprocal %75 {approx = true} : vector<2x8x1xf32> -> vector<2x8x1xf32>
    %77 = vector.broadcast %76 : vector<2x8x1xf32> to vector<2x8x8xf32>
    %78 = arith.mulf %73, %77 : vector<2x8x8xf32>
    %79 = vector.extract_strided_slice %64 {offsets = [0, 0, 0], sizes = [2, 8, 8], strides = [1, 1, 1]} : vector<2x8x32xf32> to vector<2x8x8xf32>
    "tpu.trace_start"() <{level = 10 : i32, message = "bqk,bkd->bqd"}> : () -> ()
    %cst_29 = arith.constant dense<0.000000e+00> : vector<2x8x8xf32>
    %80 = tpu.matmul %78, %79, %cst_29 {dimension_numbers = #tpu.dot_dimension_numbers<[2], [1], [1], [2], [0, 0, 0, 1, 1, 2], [0], [0]>} : vector<2x8x8xf32>, vector<2x8x8xf32>, vector<2x8x8xf32> -> vector<2x8x8xf32>
    "tpu.trace_stop"() : () -> ()
    %81 = vector.extract_strided_slice %52 {offsets = [0, 0, 8], sizes = [2, 8, 8], strides = [1, 1, 1]} : vector<2x8x32xf32> to vector<2x8x8xf32>
    %82 = vector.extract_strided_slice %58 {offsets = [0, 0, 8], sizes = [2, 8, 8], strides = [1, 1, 1]} : vector<2x8x32xf32> to vector<2x8x8xf32>
    "tpu.trace_start"() <{level = 10 : i32, message = "bqd,bkd->bqk"}> : () -> ()
    %cst_30 = arith.constant dense<0.000000e+00> : vector<2x8x8xf32>
    %83 = tpu.matmul %81, %82, %cst_30 {dimension_numbers = #tpu.dot_dimension_numbers<[2], [2], [1], [1], [0, 0, 0, 1, 1, 1], [0], [0]>} : vector<2x8x8xf32>, vector<2x8x8xf32>, vector<2x8x8xf32> -> vector<2x8x8xf32>
    "tpu.trace_stop"() : () -> ()
    %84 = arith.addf %83, %14 : vector<2x8x8xf32>
    %cst_31 = arith.constant dense<0xFF800000> : vector<2x8xf32>
    %85 = vector.multi_reduction <maximumf>, %84, %cst_31 [2] : vector<2x8x8xf32> to vector<2x8xf32>
    %86 = vector.shape_cast %85 : vector<2x8xf32> to vector<2x8x1xf32>
    %87 = vector.broadcast %86 : vector<2x8x1xf32> to vector<2x8x8xf32>
    %88 = arith.subf %84, %87 : vector<2x8x8xf32>
    %89 = math.exp %88 : vector<2x8x8xf32>
    %cst_32 = arith.constant dense<0.000000e+00> : vector<2x8xf32>
    %90 = vector.multi_reduction <add>, %89, %cst_32 [2] : vector<2x8x8xf32> to vector<2x8xf32>
    %91 = vector.shape_cast %90 : vector<2x8xf32> to vector<2x8x1xf32>
    %92 = tpu.reciprocal %91 {approx = true} : vector<2x8x1xf32> -> vector<2x8x1xf32>
    %93 = vector.broadcast %92 : vector<2x8x1xf32> to vector<2x8x8xf32>
    %94 = arith.mulf %89, %93 : vector<2x8x8xf32>
    %95 = vector.extract_strided_slice %64 {offsets = [0, 0, 8], sizes = [2, 8, 8], strides = [1, 1, 1]} : vector<2x8x32xf32> to vector<2x8x8xf32>
    "tpu.trace_start"() <{level = 10 : i32, message = "bqk,bkd->bqd"}> : () -> ()
    %cst_33 = arith.constant dense<0.000000e+00> : vector<2x8x8xf32>
    %96 = tpu.matmul %94, %95, %cst_33 {dimension_numbers = #tpu.dot_dimension_numbers<[2], [1], [1], [2], [0, 0, 0, 1, 1, 2], [0], [0]>} : vector<2x8x8xf32>, vector<2x8x8xf32>, vector<2x8x8xf32> -> vector<2x8x8xf32>
    "tpu.trace_stop"() : () -> ()
    %97 = vector.extract_strided_slice %52 {offsets = [0, 0, 16], sizes = [2, 8, 8], strides = [1, 1, 1]} : vector<2x8x32xf32> to vector<2x8x8xf32>
    %98 = vector.extract_strided_slice %58 {offsets = [0, 0, 16], sizes = [2, 8, 8], strides = [1, 1, 1]} : vector<2x8x32xf32> to vector<2x8x8xf32>
    "tpu.trace_start"() <{level = 10 : i32, message = "bqd,bkd->bqk"}> : () -> ()
    %cst_34 = arith.constant dense<0.000000e+00> : vector<2x8x8xf32>
    %99 = tpu.matmul %97, %98, %cst_34 {dimension_numbers = #tpu.dot_dimension_numbers<[2], [2], [1], [1], [0, 0, 0, 1, 1, 1], [0], [0]>} : vector<2x8x8xf32>, vector<2x8x8xf32>, vector<2x8x8xf32> -> vector<2x8x8xf32>
    "tpu.trace_stop"() : () -> ()
    %100 = arith.addf %99, %14 : vector<2x8x8xf32>
    %cst_35 = arith.constant dense<0xFF800000> : vector<2x8xf32>
    %101 = vector.multi_reduction <maximumf>, %100, %cst_35 [2] : vector<2x8x8xf32> to vector<2x8xf32>
    %102 = vector.shape_cast %101 : vector<2x8xf32> to vector<2x8x1xf32>
    %103 = vector.broadcast %102 : vector<2x8x1xf32> to vector<2x8x8xf32>
    %104 = arith.subf %100, %103 : vector<2x8x8xf32>
    %105 = math.exp %104 : vector<2x8x8xf32>
    %cst_36 = arith.constant dense<0.000000e+00> : vector<2x8xf32>
    %106 = vector.multi_reduction <add>, %105, %cst_36 [2] : vector<2x8x8xf32> to vector<2x8xf32>
    %107 = vector.shape_cast %106 : vector<2x8xf32> to vector<2x8x1xf32>
    %108 = tpu.reciprocal %107 {approx = true} : vector<2x8x1xf32> -> vector<2x8x1xf32>
    %109 = vector.broadcast %108 : vector<2x8x1xf32> to vector<2x8x8xf32>
    %110 = arith.mulf %105, %109 : vector<2x8x8xf32>
    %111 = vector.extract_strided_slice %64 {offsets = [0, 0, 16], sizes = [2, 8, 8], strides = [1, 1, 1]} : vector<2x8x32xf32> to vector<2x8x8xf32>
    "tpu.trace_start"() <{level = 10 : i32, message = "bqk,bkd->bqd"}> : () -> ()
    %cst_37 = arith.constant dense<0.000000e+00> : vector<2x8x8xf32>
    %112 = tpu.matmul %110, %111, %cst_37 {dimension_numbers = #tpu.dot_dimension_numbers<[2], [1], [1], [2], [0, 0, 0, 1, 1, 2], [0], [0]>} : vector<2x8x8xf32>, vector<2x8x8xf32>, vector<2x8x8xf32> -> vector<2x8x8xf32>
    "tpu.trace_stop"() : () -> ()
    %113 = vector.extract_strided_slice %52 {offsets = [0, 0, 24], sizes = [2, 8, 8], strides = [1, 1, 1]} : vector<2x8x32xf32> to vector<2x8x8xf32>
    %114 = vector.extract_strided_slice %58 {offsets = [0, 0, 24], sizes = [2, 8, 8], strides = [1, 1, 1]} : vector<2x8x32xf32> to vector<2x8x8xf32>
    "tpu.trace_start"() <{level = 10 : i32, message = "bqd,bkd->bqk"}> : () -> ()
    %cst_38 = arith.constant dense<0.000000e+00> : vector<2x8x8xf32>
    %115 = tpu.matmul %113, %114, %cst_38 {dimension_numbers = #tpu.dot_dimension_numbers<[2], [2], [1], [1], [0, 0, 0, 1, 1, 1], [0], [0]>} : vector<2x8x8xf32>, vector<2x8x8xf32>, vector<2x8x8xf32> -> vector<2x8x8xf32>
    "tpu.trace_stop"() : () -> ()
    %116 = arith.addf %115, %14 : vector<2x8x8xf32>
    %cst_39 = arith.constant dense<0xFF800000> : vector<2x8xf32>
    %117 = vector.multi_reduction <maximumf>, %116, %cst_39 [2] : vector<2x8x8xf32> to vector<2x8xf32>
    %118 = vector.shape_cast %117 : vector<2x8xf32> to vector<2x8x1xf32>
    %119 = vector.broadcast %118 : vector<2x8x1xf32> to vector<2x8x8xf32>
    %120 = arith.subf %116, %119 : vector<2x8x8xf32>
    %121 = math.exp %120 : vector<2x8x8xf32>
    %cst_40 = arith.constant dense<0.000000e+00> : vector<2x8xf32>
    %122 = vector.multi_reduction <add>, %121, %cst_40 [2] : vector<2x8x8xf32> to vector<2x8xf32>
    %123 = vector.shape_cast %122 : vector<2x8xf32> to vector<2x8x1xf32>
    %124 = tpu.reciprocal %123 {approx = true} : vector<2x8x1xf32> -> vector<2x8x1xf32>
    %125 = vector.broadcast %124 : vector<2x8x1xf32> to vector<2x8x8xf32>
    %126 = arith.mulf %121, %125 : vector<2x8x8xf32>
    %127 = vector.extract_strided_slice %64 {offsets = [0, 0, 24], sizes = [2, 8, 8], strides = [1, 1, 1]} : vector<2x8x32xf32> to vector<2x8x8xf32>
    "tpu.trace_start"() <{level = 10 : i32, message = "bqk,bkd->bqd"}> : () -> ()
    %cst_41 = arith.constant dense<0.000000e+00> : vector<2x8x8xf32>
    %128 = tpu.matmul %126, %127, %cst_41 {dimension_numbers = #tpu.dot_dimension_numbers<[2], [1], [1], [2], [0, 0, 0, 1, 1, 2], [0], [0]>} : vector<2x8x8xf32>, vector<2x8x8xf32>, vector<2x8x8xf32> -> vector<2x8x8xf32>
    "tpu.trace_stop"() : () -> ()
    %129 = tpu.concatenate %80, %96, %112, %128 in 2 : vector<2x8x8xf32>, vector<2x8x8xf32>, vector<2x8x8xf32>, vector<2x8x8xf32> -> vector<2x8x32xf32>
    %130 = vector.shape_cast %129 : vector<2x8x32xf32> to vector<16x32xf32>
    %131 = arith.truncf %130 : vector<16x32xf32> to vector<16x32xbf16>
    %c0_42 = arith.constant 0 : index
    %c0_43 = arith.constant 0 : index
    %c0_44 = arith.constant 0 : index
    %132 = vector.load %arg5[%c0_42, %c0_43, %c0_44] : memref<2x32x32xbf16, #tpu.memory_space<vmem>>, vector<1x32x32xbf16>
    %133 = vector.shape_cast %132 : vector<1x32x32xbf16> to vector<32x32xbf16>
    %cst_45 = arith.constant dense<0.000000e+00> : vector<16x32xf32>
    %134 = tpu.matmul %131, %133, %cst_45 {dimension_numbers = #tpu.dot_dimension_numbers<[1], [0], [0], [1], [0, 0, 1, 1], [], []>} : vector<16x32xbf16>, vector<32x32xbf16>, vector<16x32xf32> -> vector<16x32xf32>
    %c0_46 = arith.constant 0 : index
    %c5 = arith.constant 5 : index
    %c0_47 = arith.constant 0 : index
    %135 = vector.load %arg2[%c0_46, %c5, %c0_47] : memref<3x16x32xf32, #tpu.memory_space<vmem>>, vector<1x1x32xf32>
    %136 = vector.shape_cast %135 : vector<1x1x32xf32> to vector<1x32xf32>
    %137 = vector.broadcast %136 : vector<1x32xf32> to vector<16x32xf32>
    %138 = arith.addf %134, %137 : vector<16x32xf32>
    %139 = arith.addf %5, %138 : vector<16x32xf32>
    %c0_48 = arith.constant 0 : index
    %c6 = arith.constant 6 : index
    %c0_49 = arith.constant 0 : index
    %140 = vector.load %arg2[%c0_48, %c6, %c0_49] : memref<3x16x32xf32, #tpu.memory_space<vmem>>, vector<1x1x32xf32>
    %141 = vector.shape_cast %140 : vector<1x1x32xf32> to vector<1x32xf32>
    %c0_50 = arith.constant 0 : index
    %c7 = arith.constant 7 : index
    %c0_51 = arith.constant 0 : index
    %142 = vector.load %arg2[%c0_50, %c7, %c0_51] : memref<3x16x32xf32, #tpu.memory_space<vmem>>, vector<1x1x32xf32>
    %143 = vector.shape_cast %142 : vector<1x1x32xf32> to vector<1x32xf32>
    %cst_52 = arith.constant dense<0.000000e+00> : vector<16xf32>
    %144 = vector.multi_reduction <add>, %139, %cst_52 [1] : vector<16x32xf32> to vector<16xf32>
    %145 = vector.shape_cast %144 : vector<16xf32> to vector<16x1xf32>
    %cst_53 = arith.constant 3.200000e+01 : f32
    %146 = vector.broadcast %cst_53 : f32 to vector<16x1xf32>
    %147 = arith.divf %145, %146 : vector<16x1xf32>
    %148 = vector.broadcast %147 : vector<16x1xf32> to vector<16x32xf32>
    %149 = arith.subf %139, %148 : vector<16x32xf32>
    %150 = arith.mulf %149, %149 : vector<16x32xf32>
    %cst_54 = arith.constant dense<0.000000e+00> : vector<16xf32>
    %151 = vector.multi_reduction <add>, %150, %cst_54 [1] : vector<16x32xf32> to vector<16xf32>
    %152 = vector.shape_cast %151 : vector<16xf32> to vector<16x1xf32>
    %cst_55 = arith.constant 3.200000e+01 : f32
    %153 = vector.broadcast %cst_55 : f32 to vector<16x1xf32>
    %154 = arith.divf %152, %153 : vector<16x1xf32>
    %155 = vector.broadcast %147 : vector<16x1xf32> to vector<16x32xf32>
    %156 = arith.subf %139, %155 : vector<16x32xf32>
    %cst_56 = arith.constant 9.99999974E-6 : f32
    %157 = vector.broadcast %cst_56 : f32 to vector<16x1xf32>
    %158 = arith.addf %154, %157 : vector<16x1xf32>
    %159 = math.rsqrt %158 : vector<16x1xf32>
    %160 = vector.broadcast %159 : vector<16x1xf32> to vector<16x32xf32>
    %161 = arith.mulf %156, %160 : vector<16x32xf32>
    %162 = vector.broadcast %141 : vector<1x32xf32> to vector<16x32xf32>
    %163 = arith.mulf %161, %162 : vector<16x32xf32>
    %164 = vector.broadcast %143 : vector<1x32xf32> to vector<16x32xf32>
    %165 = arith.addf %163, %164 : vector<16x32xf32>
    %166 = arith.truncf %165 : vector<16x32xf32> to vector<16x32xbf16>
    %c0_57 = arith.constant 0 : index
    %c0_58 = arith.constant 0 : index
    %c0_59 = arith.constant 0 : index
    %167 = vector.load %arg6[%c0_57, %c0_58, %c0_59] : memref<2x32x128xbf16, #tpu.memory_space<vmem>>, vector<1x32x128xbf16>
    %168 = vector.shape_cast %167 : vector<1x32x128xbf16> to vector<32x128xbf16>
    %cst_60 = arith.constant dense<0.000000e+00> : vector<16x128xf32>
    %169 = tpu.matmul %166, %168, %cst_60 {dimension_numbers = #tpu.dot_dimension_numbers<[1], [0], [0], [1], [0, 0, 1, 1], [], []>} : vector<16x32xbf16>, vector<32x128xbf16>, vector<16x128xf32> -> vector<16x128xf32>
    %c0_61 = arith.constant 0 : index
    %c0_62 = arith.constant 0 : index
    %170 = vector.load %arg3[%c0_61, %c0_62] : memref<2x128xf32, #tpu.memory_space<vmem>>, vector<1x128xf32>
    %171 = vector.broadcast %170 : vector<1x128xf32> to vector<16x128xf32>
    %172 = arith.addf %169, %171 : vector<16x128xf32>
    %cst_63 = arith.constant 5.000000e-01 : f32
    %173 = vector.broadcast %cst_63 : f32 to vector<16x128xf32>
    %174 = arith.mulf %173, %172 : vector<16x128xf32>
    %cst_64 = arith.constant 4.471500e-02 : f32
    %175 = vector.broadcast %cst_64 : f32 to vector<16x128xf32>
    %176 = arith.mulf %175, %172 : vector<16x128xf32>
    %177 = arith.mulf %176, %172 : vector<16x128xf32>
    %178 = arith.mulf %177, %172 : vector<16x128xf32>
    %179 = arith.addf %172, %178 : vector<16x128xf32>
    %cst_65 = arith.constant 0.797884583 : f32
    %180 = vector.broadcast %cst_65 : f32 to vector<16x128xf32>
    %181 = arith.mulf %180, %179 : vector<16x128xf32>
    %182 = math.tanh %181 : vector<16x128xf32>
    %cst_66 = arith.constant 1.000000e+00 : f32
    %183 = vector.broadcast %cst_66 : f32 to vector<16x128xf32>
    %184 = arith.addf %183, %182 : vector<16x128xf32>
    %185 = arith.mulf %174, %184 : vector<16x128xf32>
    %186 = arith.truncf %185 : vector<16x128xf32> to vector<16x128xbf16>
    %c0_67 = arith.constant 0 : index
    %c0_68 = arith.constant 0 : index
    %c0_69 = arith.constant 0 : index
    %187 = vector.load %arg7[%c0_67, %c0_68, %c0_69] : memref<2x128x32xbf16, #tpu.memory_space<vmem>>, vector<1x128x32xbf16>
    %188 = vector.shape_cast %187 : vector<1x128x32xbf16> to vector<128x32xbf16>
    %cst_70 = arith.constant dense<0.000000e+00> : vector<16x32xf32>
    %189 = tpu.matmul %186, %188, %cst_70 {dimension_numbers = #tpu.dot_dimension_numbers<[1], [0], [0], [1], [0, 0, 1, 1], [], []>} : vector<16x128xbf16>, vector<128x32xbf16>, vector<16x32xf32> -> vector<16x32xf32>
    %190 = arith.addf %139, %189 : vector<16x32xf32>
    %c0_71 = arith.constant 0 : index
    %c8 = arith.constant 8 : index
    %c0_72 = arith.constant 0 : index
    %191 = vector.load %arg2[%c0_71, %c8, %c0_72] : memref<3x16x32xf32, #tpu.memory_space<vmem>>, vector<1x1x32xf32>
    %192 = vector.shape_cast %191 : vector<1x1x32xf32> to vector<1x32xf32>
    %193 = vector.broadcast %192 : vector<1x32xf32> to vector<16x32xf32>
    %194 = arith.addf %190, %193 : vector<16x32xf32>
    %c1_73 = arith.constant 1 : index
    %c0_74 = arith.constant 0 : index
    %c0_75 = arith.constant 0 : index
    %195 = vector.load %arg2[%c1_73, %c0_74, %c0_75] : memref<3x16x32xf32, #tpu.memory_space<vmem>>, vector<1x1x32xf32>
    %196 = vector.shape_cast %195 : vector<1x1x32xf32> to vector<1x32xf32>
    %c1_76 = arith.constant 1 : index
    %c1_77 = arith.constant 1 : index
    %c0_78 = arith.constant 0 : index
    %197 = vector.load %arg2[%c1_76, %c1_77, %c0_78] : memref<3x16x32xf32, #tpu.memory_space<vmem>>, vector<1x1x32xf32>
    %198 = vector.shape_cast %197 : vector<1x1x32xf32> to vector<1x32xf32>
    %cst_79 = arith.constant dense<0.000000e+00> : vector<16xf32>
    %199 = vector.multi_reduction <add>, %194, %cst_79 [1] : vector<16x32xf32> to vector<16xf32>
    %200 = vector.shape_cast %199 : vector<16xf32> to vector<16x1xf32>
    %cst_80 = arith.constant 3.200000e+01 : f32
    %201 = vector.broadcast %cst_80 : f32 to vector<16x1xf32>
    %202 = arith.divf %200, %201 : vector<16x1xf32>
    %203 = vector.broadcast %202 : vector<16x1xf32> to vector<16x32xf32>
    %204 = arith.subf %194, %203 : vector<16x32xf32>
    %205 = arith.mulf %204, %204 : vector<16x32xf32>
    %cst_81 = arith.constant dense<0.000000e+00> : vector<16xf32>
    %206 = vector.multi_reduction <add>, %205, %cst_81 [1] : vector<16x32xf32> to vector<16xf32>
    %207 = vector.shape_cast %206 : vector<16xf32> to vector<16x1xf32>
    %cst_82 = arith.constant 3.200000e+01 : f32
    %208 = vector.broadcast %cst_82 : f32 to vector<16x1xf32>
    %209 = arith.divf %207, %208 : vector<16x1xf32>
    %210 = vector.broadcast %202 : vector<16x1xf32> to vector<16x32xf32>
    %211 = arith.subf %194, %210 : vector<16x32xf32>
    %cst_83 = arith.constant 9.99999974E-6 : f32
    %212 = vector.broadcast %cst_83 : f32 to vector<16x1xf32>
    %213 = arith.addf %209, %212 : vector<16x1xf32>
    %214 = math.rsqrt %213 : vector<16x1xf32>
    %215 = vector.broadcast %214 : vector<16x1xf32> to vector<16x32xf32>
    %216 = arith.mulf %211, %215 : vector<16x32xf32>
    %217 = vector.broadcast %196 : vector<1x32xf32> to vector<16x32xf32>
    %218 = arith.mulf %216, %217 : vector<16x32xf32>
    %219 = vector.broadcast %198 : vector<1x32xf32> to vector<16x32xf32>
    %220 = arith.addf %218, %219 : vector<16x32xf32>
    %221 = arith.truncf %220 : vector<16x32xf32> to vector<16x32xbf16>
    %c1_84 = arith.constant 1 : index
    %c0_85 = arith.constant 0 : index
    %c0_86 = arith.constant 0 : index
    %222 = vector.load %arg4[%c1_84, %c0_85, %c0_86] : memref<2x32x96xbf16, #tpu.memory_space<vmem>>, vector<1x32x96xbf16>
    %223 = vector.shape_cast %222 : vector<1x32x96xbf16> to vector<32x96xbf16>
    %cst_87 = arith.constant dense<0.000000e+00> : vector<16x96xf32>
    %224 = tpu.matmul %221, %223, %cst_87 {dimension_numbers = #tpu.dot_dimension_numbers<[1], [0], [0], [1], [0, 0, 1, 1], [], []>} : vector<16x32xbf16>, vector<32x96xbf16>, vector<16x96xf32> -> vector<16x96xf32>
    %225 = vector.extract_strided_slice %224 {offsets = [0, 0], sizes = [16, 32], strides = [1, 1]} : vector<16x96xf32> to vector<16x32xf32>
    %c1_88 = arith.constant 1 : index
    %c2_89 = arith.constant 2 : index
    %c0_90 = arith.constant 0 : index
    %226 = vector.load %arg2[%c1_88, %c2_89, %c0_90] : memref<3x16x32xf32, #tpu.memory_space<vmem>>, vector<1x1x32xf32>
    %227 = vector.shape_cast %226 : vector<1x1x32xf32> to vector<1x32xf32>
    %228 = vector.broadcast %227 : vector<1x32xf32> to vector<16x32xf32>
    %229 = arith.addf %225, %228 : vector<16x32xf32>
    %cst_91 = arith.constant 0.353553385 : f32
    %230 = vector.broadcast %cst_91 : f32 to vector<16x32xf32>
    %231 = arith.mulf %229, %230 : vector<16x32xf32>
    %232 = vector.shape_cast %231 : vector<16x32xf32> to vector<2x8x32xf32>
    %233 = vector.extract_strided_slice %224 {offsets = [0, 32], sizes = [16, 32], strides = [1, 1]} : vector<16x96xf32> to vector<16x32xf32>
    %c1_92 = arith.constant 1 : index
    %c3_93 = arith.constant 3 : index
    %c0_94 = arith.constant 0 : index
    %234 = vector.load %arg2[%c1_92, %c3_93, %c0_94] : memref<3x16x32xf32, #tpu.memory_space<vmem>>, vector<1x1x32xf32>
    %235 = vector.shape_cast %234 : vector<1x1x32xf32> to vector<1x32xf32>
    %236 = vector.broadcast %235 : vector<1x32xf32> to vector<16x32xf32>
    %237 = arith.addf %233, %236 : vector<16x32xf32>
    %238 = vector.shape_cast %237 : vector<16x32xf32> to vector<2x8x32xf32>
    %239 = vector.extract_strided_slice %224 {offsets = [0, 64], sizes = [16, 32], strides = [1, 1]} : vector<16x96xf32> to vector<16x32xf32>
    %c1_95 = arith.constant 1 : index
    %c4_96 = arith.constant 4 : index
    %c0_97 = arith.constant 0 : index
    %240 = vector.load %arg2[%c1_95, %c4_96, %c0_97] : memref<3x16x32xf32, #tpu.memory_space<vmem>>, vector<1x1x32xf32>
    %241 = vector.shape_cast %240 : vector<1x1x32xf32> to vector<1x32xf32>
    %242 = vector.broadcast %241 : vector<1x32xf32> to vector<16x32xf32>
    %243 = arith.addf %239, %242 : vector<16x32xf32>
    %244 = vector.shape_cast %243 : vector<16x32xf32> to vector<2x8x32xf32>
    %245 = vector.extract_strided_slice %232 {offsets = [0, 0, 0], sizes = [2, 8, 8], strides = [1, 1, 1]} : vector<2x8x32xf32> to vector<2x8x8xf32>
    %246 = vector.extract_strided_slice %238 {offsets = [0, 0, 0], sizes = [2, 8, 8], strides = [1, 1, 1]} : vector<2x8x32xf32> to vector<2x8x8xf32>
    "tpu.trace_start"() <{level = 10 : i32, message = "bqd,bkd->bqk"}> : () -> ()
    %cst_98 = arith.constant dense<0.000000e+00> : vector<2x8x8xf32>
    %247 = tpu.matmul %245, %246, %cst_98 {dimension_numbers = #tpu.dot_dimension_numbers<[2], [2], [1], [1], [0, 0, 0, 1, 1, 1], [0], [0]>} : vector<2x8x8xf32>, vector<2x8x8xf32>, vector<2x8x8xf32> -> vector<2x8x8xf32>
    "tpu.trace_stop"() : () -> ()
    %248 = arith.addf %247, %14 : vector<2x8x8xf32>
    %cst_99 = arith.constant dense<0xFF800000> : vector<2x8xf32>
    %249 = vector.multi_reduction <maximumf>, %248, %cst_99 [2] : vector<2x8x8xf32> to vector<2x8xf32>
    %250 = vector.shape_cast %249 : vector<2x8xf32> to vector<2x8x1xf32>
    %251 = vector.broadcast %250 : vector<2x8x1xf32> to vector<2x8x8xf32>
    %252 = arith.subf %248, %251 : vector<2x8x8xf32>
    %253 = math.exp %252 : vector<2x8x8xf32>
    %cst_100 = arith.constant dense<0.000000e+00> : vector<2x8xf32>
    %254 = vector.multi_reduction <add>, %253, %cst_100 [2] : vector<2x8x8xf32> to vector<2x8xf32>
    %255 = vector.shape_cast %254 : vector<2x8xf32> to vector<2x8x1xf32>
    %256 = tpu.reciprocal %255 {approx = true} : vector<2x8x1xf32> -> vector<2x8x1xf32>
    %257 = vector.broadcast %256 : vector<2x8x1xf32> to vector<2x8x8xf32>
    %258 = arith.mulf %253, %257 : vector<2x8x8xf32>
    %259 = vector.extract_strided_slice %244 {offsets = [0, 0, 0], sizes = [2, 8, 8], strides = [1, 1, 1]} : vector<2x8x32xf32> to vector<2x8x8xf32>
    "tpu.trace_start"() <{level = 10 : i32, message = "bqk,bkd->bqd"}> : () -> ()
    %cst_101 = arith.constant dense<0.000000e+00> : vector<2x8x8xf32>
    %260 = tpu.matmul %258, %259, %cst_101 {dimension_numbers = #tpu.dot_dimension_numbers<[2], [1], [1], [2], [0, 0, 0, 1, 1, 2], [0], [0]>} : vector<2x8x8xf32>, vector<2x8x8xf32>, vector<2x8x8xf32> -> vector<2x8x8xf32>
    "tpu.trace_stop"() : () -> ()
    %261 = vector.extract_strided_slice %232 {offsets = [0, 0, 8], sizes = [2, 8, 8], strides = [1, 1, 1]} : vector<2x8x32xf32> to vector<2x8x8xf32>
    %262 = vector.extract_strided_slice %238 {offsets = [0, 0, 8], sizes = [2, 8, 8], strides = [1, 1, 1]} : vector<2x8x32xf32> to vector<2x8x8xf32>
    "tpu.trace_start"() <{level = 10 : i32, message = "bqd,bkd->bqk"}> : () -> ()
    %cst_102 = arith.constant dense<0.000000e+00> : vector<2x8x8xf32>
    %263 = tpu.matmul %261, %262, %cst_102 {dimension_numbers = #tpu.dot_dimension_numbers<[2], [2], [1], [1], [0, 0, 0, 1, 1, 1], [0], [0]>} : vector<2x8x8xf32>, vector<2x8x8xf32>, vector<2x8x8xf32> -> vector<2x8x8xf32>
    "tpu.trace_stop"() : () -> ()
    %264 = arith.addf %263, %14 : vector<2x8x8xf32>
    %cst_103 = arith.constant dense<0xFF800000> : vector<2x8xf32>
    %265 = vector.multi_reduction <maximumf>, %264, %cst_103 [2] : vector<2x8x8xf32> to vector<2x8xf32>
    %266 = vector.shape_cast %265 : vector<2x8xf32> to vector<2x8x1xf32>
    %267 = vector.broadcast %266 : vector<2x8x1xf32> to vector<2x8x8xf32>
    %268 = arith.subf %264, %267 : vector<2x8x8xf32>
    %269 = math.exp %268 : vector<2x8x8xf32>
    %cst_104 = arith.constant dense<0.000000e+00> : vector<2x8xf32>
    %270 = vector.multi_reduction <add>, %269, %cst_104 [2] : vector<2x8x8xf32> to vector<2x8xf32>
    %271 = vector.shape_cast %270 : vector<2x8xf32> to vector<2x8x1xf32>
    %272 = tpu.reciprocal %271 {approx = true} : vector<2x8x1xf32> -> vector<2x8x1xf32>
    %273 = vector.broadcast %272 : vector<2x8x1xf32> to vector<2x8x8xf32>
    %274 = arith.mulf %269, %273 : vector<2x8x8xf32>
    %275 = vector.extract_strided_slice %244 {offsets = [0, 0, 8], sizes = [2, 8, 8], strides = [1, 1, 1]} : vector<2x8x32xf32> to vector<2x8x8xf32>
    "tpu.trace_start"() <{level = 10 : i32, message = "bqk,bkd->bqd"}> : () -> ()
    %cst_105 = arith.constant dense<0.000000e+00> : vector<2x8x8xf32>
    %276 = tpu.matmul %274, %275, %cst_105 {dimension_numbers = #tpu.dot_dimension_numbers<[2], [1], [1], [2], [0, 0, 0, 1, 1, 2], [0], [0]>} : vector<2x8x8xf32>, vector<2x8x8xf32>, vector<2x8x8xf32> -> vector<2x8x8xf32>
    "tpu.trace_stop"() : () -> ()
    %277 = vector.extract_strided_slice %232 {offsets = [0, 0, 16], sizes = [2, 8, 8], strides = [1, 1, 1]} : vector<2x8x32xf32> to vector<2x8x8xf32>
    %278 = vector.extract_strided_slice %238 {offsets = [0, 0, 16], sizes = [2, 8, 8], strides = [1, 1, 1]} : vector<2x8x32xf32> to vector<2x8x8xf32>
    "tpu.trace_start"() <{level = 10 : i32, message = "bqd,bkd->bqk"}> : () -> ()
    %cst_106 = arith.constant dense<0.000000e+00> : vector<2x8x8xf32>
    %279 = tpu.matmul %277, %278, %cst_106 {dimension_numbers = #tpu.dot_dimension_numbers<[2], [2], [1], [1], [0, 0, 0, 1, 1, 1], [0], [0]>} : vector<2x8x8xf32>, vector<2x8x8xf32>, vector<2x8x8xf32> -> vector<2x8x8xf32>
    "tpu.trace_stop"() : () -> ()
    %280 = arith.addf %279, %14 : vector<2x8x8xf32>
    %cst_107 = arith.constant dense<0xFF800000> : vector<2x8xf32>
    %281 = vector.multi_reduction <maximumf>, %280, %cst_107 [2] : vector<2x8x8xf32> to vector<2x8xf32>
    %282 = vector.shape_cast %281 : vector<2x8xf32> to vector<2x8x1xf32>
    %283 = vector.broadcast %282 : vector<2x8x1xf32> to vector<2x8x8xf32>
    %284 = arith.subf %280, %283 : vector<2x8x8xf32>
    %285 = math.exp %284 : vector<2x8x8xf32>
    %cst_108 = arith.constant dense<0.000000e+00> : vector<2x8xf32>
    %286 = vector.multi_reduction <add>, %285, %cst_108 [2] : vector<2x8x8xf32> to vector<2x8xf32>
    %287 = vector.shape_cast %286 : vector<2x8xf32> to vector<2x8x1xf32>
    %288 = tpu.reciprocal %287 {approx = true} : vector<2x8x1xf32> -> vector<2x8x1xf32>
    %289 = vector.broadcast %288 : vector<2x8x1xf32> to vector<2x8x8xf32>
    %290 = arith.mulf %285, %289 : vector<2x8x8xf32>
    %291 = vector.extract_strided_slice %244 {offsets = [0, 0, 16], sizes = [2, 8, 8], strides = [1, 1, 1]} : vector<2x8x32xf32> to vector<2x8x8xf32>
    "tpu.trace_start"() <{level = 10 : i32, message = "bqk,bkd->bqd"}> : () -> ()
    %cst_109 = arith.constant dense<0.000000e+00> : vector<2x8x8xf32>
    %292 = tpu.matmul %290, %291, %cst_109 {dimension_numbers = #tpu.dot_dimension_numbers<[2], [1], [1], [2], [0, 0, 0, 1, 1, 2], [0], [0]>} : vector<2x8x8xf32>, vector<2x8x8xf32>, vector<2x8x8xf32> -> vector<2x8x8xf32>
    "tpu.trace_stop"() : () -> ()
    %293 = vector.extract_strided_slice %232 {offsets = [0, 0, 24], sizes = [2, 8, 8], strides = [1, 1, 1]} : vector<2x8x32xf32> to vector<2x8x8xf32>
    %294 = vector.extract_strided_slice %238 {offsets = [0, 0, 24], sizes = [2, 8, 8], strides = [1, 1, 1]} : vector<2x8x32xf32> to vector<2x8x8xf32>
    "tpu.trace_start"() <{level = 10 : i32, message = "bqd,bkd->bqk"}> : () -> ()
    %cst_110 = arith.constant dense<0.000000e+00> : vector<2x8x8xf32>
    %295 = tpu.matmul %293, %294, %cst_110 {dimension_numbers = #tpu.dot_dimension_numbers<[2], [2], [1], [1], [0, 0, 0, 1, 1, 1], [0], [0]>} : vector<2x8x8xf32>, vector<2x8x8xf32>, vector<2x8x8xf32> -> vector<2x8x8xf32>
    "tpu.trace_stop"() : () -> ()
    %296 = arith.addf %295, %14 : vector<2x8x8xf32>
    %cst_111 = arith.constant dense<0xFF800000> : vector<2x8xf32>
    %297 = vector.multi_reduction <maximumf>, %296, %cst_111 [2] : vector<2x8x8xf32> to vector<2x8xf32>
    %298 = vector.shape_cast %297 : vector<2x8xf32> to vector<2x8x1xf32>
    %299 = vector.broadcast %298 : vector<2x8x1xf32> to vector<2x8x8xf32>
    %300 = arith.subf %296, %299 : vector<2x8x8xf32>
    %301 = math.exp %300 : vector<2x8x8xf32>
    %cst_112 = arith.constant dense<0.000000e+00> : vector<2x8xf32>
    %302 = vector.multi_reduction <add>, %301, %cst_112 [2] : vector<2x8x8xf32> to vector<2x8xf32>
    %303 = vector.shape_cast %302 : vector<2x8xf32> to vector<2x8x1xf32>
    %304 = tpu.reciprocal %303 {approx = true} : vector<2x8x1xf32> -> vector<2x8x1xf32>
    %305 = vector.broadcast %304 : vector<2x8x1xf32> to vector<2x8x8xf32>
    %306 = arith.mulf %301, %305 : vector<2x8x8xf32>
    %307 = vector.extract_strided_slice %244 {offsets = [0, 0, 24], sizes = [2, 8, 8], strides = [1, 1, 1]} : vector<2x8x32xf32> to vector<2x8x8xf32>
    "tpu.trace_start"() <{level = 10 : i32, message = "bqk,bkd->bqd"}> : () -> ()
    %cst_113 = arith.constant dense<0.000000e+00> : vector<2x8x8xf32>
    %308 = tpu.matmul %306, %307, %cst_113 {dimension_numbers = #tpu.dot_dimension_numbers<[2], [1], [1], [2], [0, 0, 0, 1, 1, 2], [0], [0]>} : vector<2x8x8xf32>, vector<2x8x8xf32>, vector<2x8x8xf32> -> vector<2x8x8xf32>
    "tpu.trace_stop"() : () -> ()
    %309 = tpu.concatenate %260, %276, %292, %308 in 2 : vector<2x8x8xf32>, vector<2x8x8xf32>, vector<2x8x8xf32>, vector<2x8x8xf32> -> vector<2x8x32xf32>
    %310 = vector.shape_cast %309 : vector<2x8x32xf32> to vector<16x32xf32>
    %311 = arith.truncf %310 : vector<16x32xf32> to vector<16x32xbf16>
    %c1_114 = arith.constant 1 : index
    %c0_115 = arith.constant 0 : index
    %c0_116 = arith.constant 0 : index
    %312 = vector.load %arg5[%c1_114, %c0_115, %c0_116] : memref<2x32x32xbf16, #tpu.memory_space<vmem>>, vector<1x32x32xbf16>
    %313 = vector.shape_cast %312 : vector<1x32x32xbf16> to vector<32x32xbf16>
    %cst_117 = arith.constant dense<0.000000e+00> : vector<16x32xf32>
    %314 = tpu.matmul %311, %313, %cst_117 {dimension_numbers = #tpu.dot_dimension_numbers<[1], [0], [0], [1], [0, 0, 1, 1], [], []>} : vector<16x32xbf16>, vector<32x32xbf16>, vector<16x32xf32> -> vector<16x32xf32>
    %c1_118 = arith.constant 1 : index
    %c5_119 = arith.constant 5 : index
    %c0_120 = arith.constant 0 : index
    %315 = vector.load %arg2[%c1_118, %c5_119, %c0_120] : memref<3x16x32xf32, #tpu.memory_space<vmem>>, vector<1x1x32xf32>
    %316 = vector.shape_cast %315 : vector<1x1x32xf32> to vector<1x32xf32>
    %317 = vector.broadcast %316 : vector<1x32xf32> to vector<16x32xf32>
    %318 = arith.addf %314, %317 : vector<16x32xf32>
    %319 = arith.addf %194, %318 : vector<16x32xf32>
    %c1_121 = arith.constant 1 : index
    %c6_122 = arith.constant 6 : index
    %c0_123 = arith.constant 0 : index
    %320 = vector.load %arg2[%c1_121, %c6_122, %c0_123] : memref<3x16x32xf32, #tpu.memory_space<vmem>>, vector<1x1x32xf32>
    %321 = vector.shape_cast %320 : vector<1x1x32xf32> to vector<1x32xf32>
    %c1_124 = arith.constant 1 : index
    %c7_125 = arith.constant 7 : index
    %c0_126 = arith.constant 0 : index
    %322 = vector.load %arg2[%c1_124, %c7_125, %c0_126] : memref<3x16x32xf32, #tpu.memory_space<vmem>>, vector<1x1x32xf32>
    %323 = vector.shape_cast %322 : vector<1x1x32xf32> to vector<1x32xf32>
    %cst_127 = arith.constant dense<0.000000e+00> : vector<16xf32>
    %324 = vector.multi_reduction <add>, %319, %cst_127 [1] : vector<16x32xf32> to vector<16xf32>
    %325 = vector.shape_cast %324 : vector<16xf32> to vector<16x1xf32>
    %cst_128 = arith.constant 3.200000e+01 : f32
    %326 = vector.broadcast %cst_128 : f32 to vector<16x1xf32>
    %327 = arith.divf %325, %326 : vector<16x1xf32>
    %328 = vector.broadcast %327 : vector<16x1xf32> to vector<16x32xf32>
    %329 = arith.subf %319, %328 : vector<16x32xf32>
    %330 = arith.mulf %329, %329 : vector<16x32xf32>
    %cst_129 = arith.constant dense<0.000000e+00> : vector<16xf32>
    %331 = vector.multi_reduction <add>, %330, %cst_129 [1] : vector<16x32xf32> to vector<16xf32>
    %332 = vector.shape_cast %331 : vector<16xf32> to vector<16x1xf32>
    %cst_130 = arith.constant 3.200000e+01 : f32
    %333 = vector.broadcast %cst_130 : f32 to vector<16x1xf32>
    %334 = arith.divf %332, %333 : vector<16x1xf32>
    %335 = vector.broadcast %327 : vector<16x1xf32> to vector<16x32xf32>
    %336 = arith.subf %319, %335 : vector<16x32xf32>
    %cst_131 = arith.constant 9.99999974E-6 : f32
    %337 = vector.broadcast %cst_131 : f32 to vector<16x1xf32>
    %338 = arith.addf %334, %337 : vector<16x1xf32>
    %339 = math.rsqrt %338 : vector<16x1xf32>
    %340 = vector.broadcast %339 : vector<16x1xf32> to vector<16x32xf32>
    %341 = arith.mulf %336, %340 : vector<16x32xf32>
    %342 = vector.broadcast %321 : vector<1x32xf32> to vector<16x32xf32>
    %343 = arith.mulf %341, %342 : vector<16x32xf32>
    %344 = vector.broadcast %323 : vector<1x32xf32> to vector<16x32xf32>
    %345 = arith.addf %343, %344 : vector<16x32xf32>
    %346 = arith.truncf %345 : vector<16x32xf32> to vector<16x32xbf16>
    %c1_132 = arith.constant 1 : index
    %c0_133 = arith.constant 0 : index
    %c0_134 = arith.constant 0 : index
    %347 = vector.load %arg6[%c1_132, %c0_133, %c0_134] : memref<2x32x128xbf16, #tpu.memory_space<vmem>>, vector<1x32x128xbf16>
    %348 = vector.shape_cast %347 : vector<1x32x128xbf16> to vector<32x128xbf16>
    %cst_135 = arith.constant dense<0.000000e+00> : vector<16x128xf32>
    %349 = tpu.matmul %346, %348, %cst_135 {dimension_numbers = #tpu.dot_dimension_numbers<[1], [0], [0], [1], [0, 0, 1, 1], [], []>} : vector<16x32xbf16>, vector<32x128xbf16>, vector<16x128xf32> -> vector<16x128xf32>
    %c1_136 = arith.constant 1 : index
    %c0_137 = arith.constant 0 : index
    %350 = vector.load %arg3[%c1_136, %c0_137] : memref<2x128xf32, #tpu.memory_space<vmem>>, vector<1x128xf32>
    %351 = vector.broadcast %350 : vector<1x128xf32> to vector<16x128xf32>
    %352 = arith.addf %349, %351 : vector<16x128xf32>
    %cst_138 = arith.constant 5.000000e-01 : f32
    %353 = vector.broadcast %cst_138 : f32 to vector<16x128xf32>
    %354 = arith.mulf %353, %352 : vector<16x128xf32>
    %cst_139 = arith.constant 4.471500e-02 : f32
    %355 = vector.broadcast %cst_139 : f32 to vector<16x128xf32>
    %356 = arith.mulf %355, %352 : vector<16x128xf32>
    %357 = arith.mulf %356, %352 : vector<16x128xf32>
    %358 = arith.mulf %357, %352 : vector<16x128xf32>
    %359 = arith.addf %352, %358 : vector<16x128xf32>
    %cst_140 = arith.constant 0.797884583 : f32
    %360 = vector.broadcast %cst_140 : f32 to vector<16x128xf32>
    %361 = arith.mulf %360, %359 : vector<16x128xf32>
    %362 = math.tanh %361 : vector<16x128xf32>
    %cst_141 = arith.constant 1.000000e+00 : f32
    %363 = vector.broadcast %cst_141 : f32 to vector<16x128xf32>
    %364 = arith.addf %363, %362 : vector<16x128xf32>
    %365 = arith.mulf %354, %364 : vector<16x128xf32>
    %366 = arith.truncf %365 : vector<16x128xf32> to vector<16x128xbf16>
    %c1_142 = arith.constant 1 : index
    %c0_143 = arith.constant 0 : index
    %c0_144 = arith.constant 0 : index
    %367 = vector.load %arg7[%c1_142, %c0_143, %c0_144] : memref<2x128x32xbf16, #tpu.memory_space<vmem>>, vector<1x128x32xbf16>
    %368 = vector.shape_cast %367 : vector<1x128x32xbf16> to vector<128x32xbf16>
    %cst_145 = arith.constant dense<0.000000e+00> : vector<16x32xf32>
    %369 = tpu.matmul %366, %368, %cst_145 {dimension_numbers = #tpu.dot_dimension_numbers<[1], [0], [0], [1], [0, 0, 1, 1], [], []>} : vector<16x128xbf16>, vector<128x32xbf16>, vector<16x32xf32> -> vector<16x32xf32>
    %370 = arith.addf %319, %369 : vector<16x32xf32>
    %c1_146 = arith.constant 1 : index
    %c8_147 = arith.constant 8 : index
    %c0_148 = arith.constant 0 : index
    %371 = vector.load %arg2[%c1_146, %c8_147, %c0_148] : memref<3x16x32xf32, #tpu.memory_space<vmem>>, vector<1x1x32xf32>
    %372 = vector.shape_cast %371 : vector<1x1x32xf32> to vector<1x32xf32>
    %373 = vector.broadcast %372 : vector<1x32xf32> to vector<16x32xf32>
    %374 = arith.addf %370, %373 : vector<16x32xf32>
    %375 = vector.shape_cast %374 : vector<16x32xf32> to vector<2x8x32xf32>
    %376 = vector.extract_strided_slice %375 {offsets = [0, 7, 0], sizes = [2, 1, 32], strides = [1, 1, 1]} : vector<2x8x32xf32> to vector<2x1x32xf32>
    %377 = vector.shape_cast %376 : vector<2x1x32xf32> to vector<2x32xf32>
    %c2_149 = arith.constant 2 : index
    %c0_150 = arith.constant 0 : index
    %c0_151 = arith.constant 0 : index
    %378 = vector.load %arg2[%c2_149, %c0_150, %c0_151] : memref<3x16x32xf32, #tpu.memory_space<vmem>>, vector<1x1x32xf32>
    %379 = vector.shape_cast %378 : vector<1x1x32xf32> to vector<1x32xf32>
    %c2_152 = arith.constant 2 : index
    %c1_153 = arith.constant 1 : index
    %c0_154 = arith.constant 0 : index
    %380 = vector.load %arg2[%c2_152, %c1_153, %c0_154] : memref<3x16x32xf32, #tpu.memory_space<vmem>>, vector<1x1x32xf32>
    %381 = vector.shape_cast %380 : vector<1x1x32xf32> to vector<1x32xf32>
    %cst_155 = arith.constant dense<0.000000e+00> : vector<2xf32>
    %382 = vector.multi_reduction <add>, %377, %cst_155 [1] : vector<2x32xf32> to vector<2xf32>
    %383 = vector.shape_cast %382 : vector<2xf32> to vector<2x1xf32>
    %cst_156 = arith.constant 3.200000e+01 : f32
    %384 = vector.broadcast %cst_156 : f32 to vector<2x1xf32>
    %385 = arith.divf %383, %384 : vector<2x1xf32>
    %386 = vector.broadcast %385 : vector<2x1xf32> to vector<2x32xf32>
    %387 = arith.subf %377, %386 : vector<2x32xf32>
    %388 = arith.mulf %387, %387 : vector<2x32xf32>
    %cst_157 = arith.constant dense<0.000000e+00> : vector<2xf32>
    %389 = vector.multi_reduction <add>, %388, %cst_157 [1] : vector<2x32xf32> to vector<2xf32>
    %390 = vector.shape_cast %389 : vector<2xf32> to vector<2x1xf32>
    %cst_158 = arith.constant 3.200000e+01 : f32
    %391 = vector.broadcast %cst_158 : f32 to vector<2x1xf32>
    %392 = arith.divf %390, %391 : vector<2x1xf32>
    %393 = vector.broadcast %385 : vector<2x1xf32> to vector<2x32xf32>
    %394 = arith.subf %377, %393 : vector<2x32xf32>
    %cst_159 = arith.constant 9.99999974E-6 : f32
    %395 = vector.broadcast %cst_159 : f32 to vector<2x1xf32>
    %396 = arith.addf %392, %395 : vector<2x1xf32>
    %397 = math.rsqrt %396 : vector<2x1xf32>
    %398 = vector.broadcast %397 : vector<2x1xf32> to vector<2x32xf32>
    %399 = arith.mulf %394, %398 : vector<2x32xf32>
    %400 = vector.broadcast %379 : vector<1x32xf32> to vector<2x32xf32>
    %401 = arith.mulf %399, %400 : vector<2x32xf32>
    %402 = vector.broadcast %381 : vector<1x32xf32> to vector<2x32xf32>
    %403 = arith.addf %401, %402 : vector<2x32xf32>
    %404 = arith.truncf %403 : vector<2x32xf32> to vector<2x32xbf16>
    %c0_160 = arith.constant 0 : index
    %c0_161 = arith.constant 0 : index
    %405 = vector.load %arg8[%c0_160, %c0_161] : memref<32x128xbf16, #tpu.memory_space<vmem>>, vector<32x128xbf16>
    %cst_162 = arith.constant dense<0.000000e+00> : vector<2x128xf32>
    %406 = tpu.matmul %404, %405, %cst_162 {dimension_numbers = #tpu.dot_dimension_numbers<[1], [0], [0], [1], [0, 0, 1, 1], [], []>} : vector<2x32xbf16>, vector<32x128xbf16>, vector<2x128xf32> -> vector<2x128xf32>
    %c0_163 = arith.constant 0 : index
    %c0_164 = arith.constant 0 : index
    %407 = vector.load %arg9[%c0_163, %c0_164] : memref<2x128xf32, #tpu.memory_space<vmem>>, vector<2x128xf32>
    tpu.vector_store %arg9[%c0_163, %c0_164], %406 {strides = array<i32>} : memref<2x128xf32, #tpu.memory_space<vmem>>, vector<2x128xf32>,
    return
  }
}

</mosaic_0001>

<llo_original>
// kernel: _lambda_.1
$region0: #{_lambda_.1}
  #allocation0 [shape = 'u32[]', space=smem, size = 0x4, offset = 0x4, fixed_abs, tag = 'smem constant byte address 0x4 - core index']
  #allocation1 [shape = 'u32[72,128]{1,0:T(1,128)}', space=vmem, size = 0x9000, scoped, tag = 'internal scratch']
  %s0 = inlined_call_operand.vmem [shape: f32[2,8,32], index: 0, kind: input, shape index: {}]
  %s1 = inlined_call_operand.vmem [shape: f32[8,32], index: 1, kind: input, shape index: {}]
  %s2 = inlined_call_operand.vmem [shape: f32[3,16,32], index: 2, kind: input, shape index: {}]
  %s3 = inlined_call_operand.vmem [shape: f32[2,128], index: 3, kind: input, shape index: {}]
  %s4 = inlined_call_operand.vmem [shape: bf16[2,32,96], index: 4, kind: input, shape index: {}]
  %s5 = inlined_call_operand.vmem [shape: bf16[2,32,32], index: 5, kind: input, shape index: {}]
  %s6 = inlined_call_operand.vmem [shape: bf16[2,32,128], index: 6, kind: input, shape index: {}]
  %s7 = inlined_call_operand.vmem [shape: bf16[2,128,32], index: 7, kind: input, shape index: {}]
  %s8 = inlined_call_operand.vmem [shape: bf16[32,128], index: 8, kind: input, shape index: {}]
  %s9 = inlined_call_operand.hbm [shape: f32[2,128], index: 9, kind: output, shape index: {}]
  %s10 = sld [smem:[#allocation0]]
  $region46: #{_lambda_.1} parent=0
    _
  %s12 = ssub.s32 1, %s10
  %s13 = scalar_select 0, %s12, %s10
  $region1: #{_lambda_.1} parent=0
    #allocation2 [shape = 'u8[1024]{0}', space=vmem, size = 0x400, scoped, tag = 'output window, operand 0, single buffered']
    #allocation3 [shape = 's32[1]{0}', space=sflag, size = 0x4, scoped, tag = 'scoped memory for _lambda_.1']
    %14 = vsyncpa [#allocation3], 0
    // Predicated region
    $region2: #{_lambda_.1} parent=1 // pred_check
      _
    $region3: #{_lambda_.1} parent=1 // pred_check_branch
      %16 = sbr.rel (0) target = $region5
    $region4: #{_lambda_.1} parent=1 // pred_region
      _
    $region5: #{_lambda_.1} parent=1 // pred_fallthru
      _
    // Predicated region
    $region6: #{_lambda_.1} parent=1 // pred_check
      _
    $region7: #{_lambda_.1} parent=1 // pred_check_branch
      %18 = sbr.rel (0) target = $region9
    $region8: #{_lambda_.1} parent=1 // pred_region
      _
    $region9: #{_lambda_.1} parent=1 // pred_fallthru
      _
    // Predicated region
    $region10: #{_lambda_.1} parent=1 // pred_check
      _
    $region11: #{_lambda_.1} parent=1 // pred_check_branch
      %20 = sbr.rel (0) target = $region13
    $region12: #{_lambda_.1} parent=1 // pred_region
      _
    $region13: #{_lambda_.1} parent=1 // pred_fallthru
      _
    // Predicated region
    $region14: #{_lambda_.1} parent=1 // pred_check
      _
    $region15: #{_lambda_.1} parent=1 // pred_check_branch
      %22 = sbr.rel (0) target = $region17
    $region16: #{_lambda_.1} parent=1 // pred_region
      _
    $region17: #{_lambda_.1} parent=1 // pred_fallthru
      _
    // Predicated region
    $region18: #{_lambda_.1} parent=1 // pred_check
      _
    $region19: #{_lambda_.1} parent=1 // pred_check_branch
      %24 = sbr.rel (0) target = $region21
    $region20: #{_lambda_.1} parent=1 // pred_region
      _
    $region21: #{_lambda_.1} parent=1 // pred_fallthru
      _
    // Predicated region
    $region22: #{_lambda_.1} parent=1 // pred_check
      _
    $region23: #{_lambda_.1} parent=1 // pred_check_branch
      %26 = sbr.rel (0) target = $region25
    $region24: #{_lambda_.1} parent=1 // pred_region
      _
    $region25: #{_lambda_.1} parent=1 // pred_fallthru
      _
    // Predicated region
    $region26: #{_lambda_.1} parent=1 // pred_check
      _
    $region27: #{_lambda_.1} parent=1 // pred_check_branch
      %28 = sbr.rel (0) target = $region29
    $region28: #{_lambda_.1} parent=1 // pred_region
      _
    $region29: #{_lambda_.1} parent=1 // pred_fallthru
      _
    // Predicated region
    $region30: #{_lambda_.1} parent=1 // pred_check
      _
    $region31: #{_lambda_.1} parent=1 // pred_check_branch
      %30 = sbr.rel (0) target = $region33
    $region32: #{_lambda_.1} parent=1 // pred_region
      _
    $region33: #{_lambda_.1} parent=1 // pred_fallthru
      _
    // Predicated region
    $region34: #{_lambda_.1} parent=1 // pred_check
      _
    $region35: #{_lambda_.1} parent=1 // pred_check_branch
      %32 = sbr.rel (0) target = $region37
    $region36: #{_lambda_.1} parent=1 // pred_region
      _
    $region37: #{_lambda_.1} parent=1 // pred_fallthru
      _
    %v34 = vld [vmem:[%s0] sm:$0xff]
    %v35 = vld [vmem:[%s0 + $0x8] sm:$0xff]
    %v36 = vld [vmem:[%s1] sm:$0xff]
    %v37 = vadd.f32 %v34, %v36
    %v38 = vadd.f32 %v35, %v36
    %v39 = vlaneseq
    %v40 = vshrl.u32 %v39, 7
    %v41 = vlaneseq
    %v42 = vand.u32 %v41, 127
    %vm43 = vcmp.le.s32.totalorder %v42, %v40
    %v44 = vsel %vm43, 0.0, -1e+30
    %v45 = vld [vmem:[%s2] sm:$0x1]
    %v46 = vld [vmem:[%s2 + $0x1] sm:$0x1]
    %vm47 = vcmask 261120
    %v48 = vsel %vm47, %v37, 0.0
    %49 = vadd.xlane.f32.xlu0 %v48
    %v50 = vpop.xlane.xlu0 %49
    %v51 = vsel %vm47, %v38, 0.0
    %52 = vadd.xlane.f32.xlu0 %v51
    %v53 = vpop.xlane.xlu0 %52
    %v54 = vrcp.pop 32.0
    %v55 = vmul.f32 32.0, %v54
    %v56 = vsub.f32 1.0, %v55
    %v57 = vmul.f32 %v54, %v56
    %v58 = vadd.f32 %v54, %v57
    %vm59 = vweird.f32 %v54
    %v60 = vsel %vm59, %v54, %v58
    %v61 = vmul.f32 %v50, %v60
    %v62 = vmul.f32 %v53, %v60
    %v63 = vsub.f32 %v37, %v61
    %v64 = vsub.f32 %v38, %v62
    %v65 = vmul.f32 %v63, %v63
    %v66 = vmul.f32 %v64, %v64
    %v67 = vsel %vm47, %v65, 0.0
    %68 = vadd.xlane.f32.xlu0 %v67
    %v69 = vpop.xlane.xlu0 %68
    %v70 = vsel %vm47, %v66, 0.0
    %71 = vadd.xlane.f32.xlu0 %v70
    %v72 = vpop.xlane.xlu0 %71
    %v73 = vmul.f32 %v69, %v60
    %v74 = vmul.f32 %v72, %v60
    %v75 = vadd.f32 %v73, 1e-05
    %v76 = vadd.f32 %v74, 1e-05
    %v77 = vrsqrt.pop %v75
    %v78 = vmul.f32 %v77, %v75
    %v79 = vmul.f32 %v78, %v77
    %v80 = vmul.f32 0.5, %v79
    %v81 = vsub.f32 1.5, %v80
    %v82 = vmul.f32 %v77, %v81
    %vm83 = vweird.f32 %v75
    %vm84 = vweird.f32 %v77
    %vm85 = vmor %vm83, %vm84
    %v86 = vsel %vm85, %v77, %v82
    %v87 = vrsqrt.pop %v76
    %v88 = vmul.f32 %v87, %v76
    %v89 = vmul.f32 %v88, %v87
    %v90 = vmul.f32 0.5, %v89
    %v91 = vsub.f32 1.5, %v90
    %v92 = vmul.f32 %v87, %v91
    %vm93 = vweird.f32 %v76
    %vm94 = vweird.f32 %v87
    %vm95 = vmor %vm93, %vm94
    %v96 = vsel %vm95, %v87, %v92
    %v97 = vmul.f32 %v63, %v86
    %v98 = vmul.f32 %v64, %v96
    %v99 = vperm.slane %v45, 0
    %v100 = vmul.f32 %v97, %v99
    %v101 = vmul.f32 %v98, %v99
    %v102 = vperm.slane %v46, 0
    %v103 = vadd.f32 %v100, %v102
    %v104 = vadd.f32 %v101, %v102
    %v105 = vpack.c.bf16 %v104, %v103
    %v106 = vld [vmem:[%s4] sm:$0xf]
    %v107 = vld [vmem:[%s4 + $0x4] sm:$0xf]
    %v108 = vld [vmem:[%s4 + $0x8] sm:$0xf]
    %v109 = vld [vmem:[%s4 + $0xc] sm:$0xf]
    %v114 = vunpack.c.l.b16 %v106
    %v115 = vunpack.c.l.b16 %v107
    %v116 = vunpack.c.l.b16 %v108
    %v117 = vunpack.c.l.b16 %v109
    %v118 = vpack.c.b16 %v115, %v114
    %v119 = vpack.c.b16 %v117, %v116
    %v123 = vsel %vm47, %v105, 0
    %125 = vmatpush.bf16.msra.mxu0 0
    %126 = vmatpush.bf16.msra.mxu0 0
    %127 = vmatpush.bf16.msra.mxu0 0
    %128 = vmatpush.bf16.msra.mxu0 0
    %129 = vmatpush.bf16.msra.mxu0 0
    %130 = vmatpush.bf16.msra.mxu0 0
    %131 = vmatpush.bf16.msra.mxu0 %v119
    %132 = vmatpush.bf16.msra.mxu0 %v118
    %133 = vmatmul.bf16.gmra.mxu0 %v123
    %v134 = vpop.f32.mrf.mxu0
    %v135 = vadd.f32 0.0, %v134
    %v136 = vpop.f32.mrf.mxu0
    %v137 = vadd.f32 0.0, %v136
    %138 = vdwg.mxu0
    %v139 = vld [vmem:[%s2 + $0x2] sm:$0x1]
    %v140 = vperm.slane %v139, 0
    %v141 = vadd.f32 %v135, %v140
    %v142 = vadd.f32 %v137, %v140
    %v143 = vmul.f32 %v141, 0.35355338
    %v144 = vmul.f32 %v142, 0.35355338
    %v145 = vld [vmem:[%s2 + $0x3] sm:$0x1]
    %v146 = vperm.slane %v145, 0
    %148 = vrot.lane.b32.xlu0 %v146, 32
    %v149 = vpop.permute.xlu0 %148
    %v151 = vadd.f32 %v135, %v149
    %v152 = vadd.f32 %v137, %v149
    %v153 = vld [vmem:[%s2 + $0x4] sm:$0x1]
    %v154 = vperm.slane %v153, 0
    %156 = vrot.lane.b32.xlu0 %v154, 64
    %v157 = vpop.permute.xlu0 %156
    %v159 = vadd.f32 %v135, %v157
    %v160 = vadd.f32 %v137, %v157
    %162 = vrot.lane.b32.xlu0 %v151, 96
    %v163 = vpop.permute.xlu0 %162
    %vm164 = vcmask 64512
    %v166 = vsel %vm164, %v143, 0
    %v168 = vsel %vm164, %v163, 0
    %170 = vmatpush.xpose.msra.mxu0 0.0
    %171 = vmatpush.xpose.msra.mxu0 0.0
    %172 = vmatpush.xpose.msra.mxu0 0.0
    %173 = vmatpush.xpose.msra.mxu0 0.0
    %174 = vmatpush.xpose.msra.mxu0 0.0
    %175 = vmatpush.xpose.msra.mxu0 0.0
    %176 = vmatpush.xpose.msra.mxu0 0.0
    %177 = vmatpush.xpose.msra.mxu0 0.0
    %178 = vmatpush.xpose.msra.mxu0 0.0
    %179 = vmatpush.xpose.msra.mxu0 0.0
    %180 = vmatpush.xpose.msra.mxu0 0.0
    %181 = vmatpush.xpose.msra.mxu0 0.0
    %182 = vmatpush.xpose.msra.mxu0 0.0
    %183 = vmatpush.xpose.msra.mxu0 0.0
    %184 = vmatpush.xpose.msra.mxu0 0.0
    %185 = vmatpush.xpose.msra.mxu0 %v168
    %186 = vmatmul.f32.gmra.mxu0 %v166
    %v187 = vpop.f32.mrf.mxu0
    %v188 = vadd.f32 %v44, %v187
    %189 = vdwg.mxu0
    %191 = vrot.lane.b32.xlu0 %v152, 96
    %v192 = vpop.permute.xlu0 %191
    %v194 = vsel %vm164, %v144, 0
    %v196 = vsel %vm164, %v192, 0
    %198 = vmatpush.xpose.msra.mxu0 0.0
    %199 = vmatpush.xpose.msra.mxu0 0.0
    %200 = vmatpush.xpose.msra.mxu0 0.0
    %201 = vmatpush.xpose.msra.mxu0 0.0
    %202 = vmatpush.xpose.msra.mxu0 0.0
    %203 = vmatpush.xpose.msra.mxu0 0.0
    %204 = vmatpush.xpose.msra.mxu0 0.0
    %205 = vmatpush.xpose.msra.mxu0 0.0
    %206 = vmatpush.xpose.msra.mxu0 0.0
    %207 = vmatpush.xpose.msra.mxu0 0.0
    %208 = vmatpush.xpose.msra.mxu0 0.0
    %209 = vmatpush.xpose.msra.mxu0 0.0
    %210 = vmatpush.xpose.msra.mxu0 0.0
    %211 = vmatpush.xpose.msra.mxu0 0.0
    %212 = vmatpush.xpose.msra.mxu0 0.0
    %213 = vmatpush.xpose.msra.mxu0 %v196
    %214 = vmatmul.f32.gmra.mxu0 %v194
    %v215 = vpop.f32.mrf.mxu0
    %v216 = vadd.f32 %v44, %v215
    %217 = vdwg.mxu0
    %v218 = vsel %vm164, %v188, -inf
    %219 = vmax.xlane.f32.xlu0 %v218
    %v220 = vpop.xlane.xlu0 %219
    %v221 = vsel %vm164, %v216, -inf
    %222 = vmax.xlane.f32.xlu0 %v221
    %v223 = vpop.xlane.xlu0 %222
    %v224 = vsub.f32 %v188, %v220
    %v225 = vsub.f32 %v216, %v223
    %v226 = vmul.f32 %v224, 1.442695
    %v227 = vpow.pop %v226
    %v228 = vmul.f32 %v225, 1.442695
    %v229 = vpow.pop %v228
    %v230 = vsel %vm164, %v227, 0.0
    %231 = vadd.xlane.f32.xlu0 %v230
    %v232 = vpop.xlane.xlu0 %231
    %v233 = vsel %vm164, %v229, 0.0
    %234 = vadd.xlane.f32.xlu0 %v233
    %v235 = vpop.xlane.xlu0 %234
    %v236 = vrcp.pop %v232
    %v237 = vrcp.pop %v235
    %v238 = vmul.f32 %v227, %v236
    %v239 = vmul.f32 %v229, %v237
    %241 = vrot.lane.b32.xlu0 %v159, 64
    %v242 = vpop.permute.xlu0 %241
    %v245 = vsel %vm164, %v238, 0
    %247 = vmatpush.msra.mxu0 0.0
    %248 = vmatpush.msra.mxu0 0.0
    %249 = vmatpush.msra.mxu0 0.0
    %250 = vmatpush.msra.mxu0 0.0
    %251 = vmatpush.msra.mxu0 0.0
    %252 = vmatpush.msra.mxu0 0.0
    %253 = vmatpush.msra.mxu0 0.0
    %254 = vmatpush.msra.mxu0 0.0
    %255 = vmatpush.msra.mxu0 0.0
    %256 = vmatpush.msra.mxu0 0.0
    %257 = vmatpush.msra.mxu0 0.0
    %258 = vmatpush.msra.mxu0 0.0
    %259 = vmatpush.msra.mxu0 0.0
    %260 = vmatpush.msra.mxu0 0.0
    %261 = vmatpush.msra.mxu0 0.0
    %262 = vmatpush.msra.mxu0 %v242
    %263 = vmatmul.f32.gmra.mxu0 %v245
    %v264 = vpop.f32.mrf.mxu0
    %v265 = vadd.f32 0.0, %v264
    %266 = vdwg.mxu0
    %268 = vrot.lane.b32.xlu0 %v160, 64
    %v269 = vpop.permute.xlu0 %268
    %v272 = vsel %vm164, %v239, 0
    %274 = vmatpush.msra.mxu0 0.0
    %275 = vmatpush.msra.mxu0 0.0
    %276 = vmatpush.msra.mxu0 0.0
    %277 = vmatpush.msra.mxu0 0.0
    %278 = vmatpush.msra.mxu0 0.0
    %279 = vmatpush.msra.mxu0 0.0
    %280 = vmatpush.msra.mxu0 0.0
    %281 = vmatpush.msra.mxu0 0.0
    %282 = vmatpush.msra.mxu0 0.0
    %283 = vmatpush.msra.mxu0 0.0
    %284 = vmatpush.msra.mxu0 0.0
    %285 = vmatpush.msra.mxu0 0.0
    %286 = vmatpush.msra.mxu0 0.0
    %287 = vmatpush.msra.mxu0 0.0
    %288 = vmatpush.msra.mxu0 0.0
    %289 = vmatpush.msra.mxu0 %v269
    %290 = vmatmul.f32.gmra.mxu0 %v272
    %v291 = vpop.f32.mrf.mxu0
    %v292 = vadd.f32 0.0, %v291
    %293 = vdwg.mxu0
    %294 = vrot.lane.b32.xlu0 %v143, 120
    %v295 = vpop.permute.xlu0 %294
    %296 = vrot.lane.b32.xlu0 %v151, 88
    %v297 = vpop.permute.xlu0 %296
    %v298 = vsel %vm164, %v295, 0
    %v300 = vsel %vm164, %v297, 0
    %302 = vmatpush.xpose.msra.mxu0 0.0
    %303 = vmatpush.xpose.msra.mxu0 0.0
    %304 = vmatpush.xpose.msra.mxu0 0.0
    %305 = vmatpush.xpose.msra.mxu0 0.0
    %306 = vmatpush.xpose.msra.mxu0 0.0
    %307 = vmatpush.xpose.msra.mxu0 0.0
    %308 = vmatpush.xpose.msra.mxu0 0.0
    %309 = vmatpush.xpose.msra.mxu0 0.0
    %310 = vmatpush.xpose.msra.mxu0 0.0
    %311 = vmatpush.xpose.msra.mxu0 0.0
    %312 = vmatpush.xpose.msra.mxu0 0.0
    %313 = vmatpush.xpose.msra.mxu0 0.0
    %314 = vmatpush.xpose.msra.mxu0 0.0
    %315 = vmatpush.xpose.msra.mxu0 0.0
    %316 = vmatpush.xpose.msra.mxu0 0.0
    %317 = vmatpush.xpose.msra.mxu0 %v300
    %318 = vmatmul.f32.gmra.mxu0 %v298
    %v319 = vpop.f32.mrf.mxu0
    %v320 = vadd.f32 %v44, %v319
    %321 = vdwg.mxu0
    %322 = vrot.lane.b32.xlu0 %v144, 120
    %v323 = vpop.permute.xlu0 %322
    %324 = vrot.lane.b32.xlu0 %v152, 88
    %v325 = vpop.permute.xlu0 %324
    %v326 = vsel %vm164, %v323, 0
    %v328 = vsel %vm164, %v325, 0
    %330 = vmatpush.xpose.msra.mxu0 0.0
    %331 = vmatpush.xpose.msra.mxu0 0.0
    %332 = vmatpush.xpose.msra.mxu0 0.0
    %333 = vmatpush.xpose.msra.mxu0 0.0
    %334 = vmatpush.xpose.msra.mxu0 0.0
    %335 = vmatpush.xpose.msra.mxu0 0.0
    %336 = vmatpush.xpose.msra.mxu0 0.0
    %337 = vmatpush.xpose.msra.mxu0 0.0
    %338 = vmatpush.xpose.msra.mxu0 0.0
    %339 = vmatpush.xpose.msra.mxu0 0.0
    %340 = vmatpush.xpose.msra.mxu0 0.0
    %341 = vmatpush.xpose.msra.mxu0 0.0
    %342 = vmatpush.xpose.msra.mxu0 0.0
    %343 = vmatpush.xpose.msra.mxu0 0.0
    %344 = vmatpush.xpose.msra.mxu0 0.0
    %345 = vmatpush.xpose.msra.mxu0 %v328
    %346 = vmatmul.f32.gmra.mxu0 %v326
    %v347 = vpop.f32.mrf.mxu0
    %v348 = vadd.f32 %v44, %v347
    %349 = vdwg.mxu0
    %v350 = vsel %vm164, %v320, -inf
    %351 = vmax.xlane.f32.xlu0 %v350
    %v352 = vpop.xlane.xlu0 %351
    %v353 = vsel %vm164, %v348, -inf
    %354 = vmax.xlane.f32.xlu0 %v353
    %v355 = vpop.xlane.xlu0 %354
    %v356 = vsub.f32 %v320, %v352
    %v357 = vsub.f32 %v348, %v355
    %v358 = vmul.f32 %v356, 1.442695
    %v359 = vpow.pop %v358
    %v360 = vmul.f32 %v357, 1.442695
    %v361 = vpow.pop %v360
    %v362 = vsel %vm164, %v359, 0.0
    %363 = vadd.xlane.f32.xlu0 %v362
    %v364 = vpop.xlane.xlu0 %363
    %v365 = vsel %vm164, %v361, 0.0
    %366 = vadd.xlane.f32.xlu0 %v365
    %v367 = vpop.xlane.xlu0 %366
    %v368 = vrcp.pop %v364
    %v369 = vrcp.pop %v367
    %v370 = vmul.f32 %v359, %v368
    %v371 = vmul.f32 %v361, %v369
    %372 = vrot.lane.b32.xlu0 %v159, 56
    %v373 = vpop.permute.xlu0 %372
    %v376 = vsel %vm164, %v370, 0
    %378 = vmatpush.msra.mxu0 0.0
    %379 = vmatpush.msra.mxu0 0.0
    %380 = vmatpush.msra.mxu0 0.0
    %381 = vmatpush.msra.mxu0 0.0
    %382 = vmatpush.msra.mxu0 0.0
    %383 = vmatpush.msra.mxu0 0.0
    %384 = vmatpush.msra.mxu0 0.0
    %385 = vmatpush.msra.mxu0 0.0
    %386 = vmatpush.msra.mxu0 0.0
    %387 = vmatpush.msra.mxu0 0.0
    %388 = vmatpush.msra.mxu0 0.0
    %389 = vmatpush.msra.mxu0 0.0
    %390 = vmatpush.msra.mxu0 0.0
    %391 = vmatpush.msra.mxu0 0.0
    %392 = vmatpush.msra.mxu0 0.0
    %393 = vmatpush.msra.mxu0 %v373
    %394 = vmatmul.f32.gmra.mxu0 %v376
    %v395 = vpop.f32.mrf.mxu0
    %v396 = vadd.f32 0.0, %v395
    %397 = vdwg.mxu0
    %398 = vrot.lane.b32.xlu0 %v160, 56
    %v399 = vpop.permute.xlu0 %398
    %v402 = vsel %vm164, %v371, 0
    %404 = vmatpush.msra.mxu0 0.0
    %405 = vmatpush.msra.mxu0 0.0
    %406 = vmatpush.msra.mxu0 0.0
    %407 = vmatpush.msra.mxu0 0.0
    %408 = vmatpush.msra.mxu0 0.0
    %409 = vmatpush.msra.mxu0 0.0
    %410 = vmatpush.msra.mxu0 0.0
    %411 = vmatpush.msra.mxu0 0.0
    %412 = vmatpush.msra.mxu0 0.0
    %413 = vmatpush.msra.mxu0 0.0
    %414 = vmatpush.msra.mxu0 0.0
    %415 = vmatpush.msra.mxu0 0.0
    %416 = vmatpush.msra.mxu0 0.0
    %417 = vmatpush.msra.mxu0 0.0
    %418 = vmatpush.msra.mxu0 0.0
    %419 = vmatpush.msra.mxu0 %v399
    %420 = vmatmul.f32.gmra.mxu0 %v402
    %v421 = vpop.f32.mrf.mxu0
    %v422 = vadd.f32 0.0, %v421
    %423 = vdwg.mxu0
    %424 = vrot.lane.b32.xlu0 %v143, 112
    %v425 = vpop.permute.xlu0 %424
    %426 = vrot.lane.b32.xlu0 %v151, 80
    %v427 = vpop.permute.xlu0 %426
    %v428 = vsel %vm164, %v425, 0
    %v430 = vsel %vm164, %v427, 0
    %432 = vmatpush.xpose.msra.mxu0 0.0
    %433 = vmatpush.xpose.msra.mxu0 0.0
    %434 = vmatpush.xpose.msra.mxu0 0.0
    %435 = vmatpush.xpose.msra.mxu0 0.0
    %436 = vmatpush.xpose.msra.mxu0 0.0
    %437 = vmatpush.xpose.msra.mxu0 0.0
    %438 = vmatpush.xpose.msra.mxu0 0.0
    %439 = vmatpush.xpose.msra.mxu0 0.0
    %440 = vmatpush.xpose.msra.mxu0 0.0
    %441 = vmatpush.xpose.msra.mxu0 0.0
    %442 = vmatpush.xpose.msra.mxu0 0.0
    %443 = vmatpush.xpose.msra.mxu0 0.0
    %444 = vmatpush.xpose.msra.mxu0 0.0
    %445 = vmatpush.xpose.msra.mxu0 0.0
    %446 = vmatpush.xpose.msra.mxu0 0.0
    %447 = vmatpush.xpose.msra.mxu0 %v430
    %448 = vmatmul.f32.gmra.mxu0 %v428
    %v449 = vpop.f32.mrf.mxu0
    %v450 = vadd.f32 %v44, %v449
    %451 = vdwg.mxu0
    %452 = vrot.lane.b32.xlu0 %v144, 112
    %v453 = vpop.permute.xlu0 %452
    %454 = vrot.lane.b32.xlu0 %v152, 80
    %v455 = vpop.permute.xlu0 %454
    %v456 = vsel %vm164, %v453, 0
    %v458 = vsel %vm164, %v455, 0
    %460 = vmatpush.xpose.msra.mxu0 0.0
    %461 = vmatpush.xpose.msra.mxu0 0.0
    %462 = vmatpush.xpose.msra.mxu0 0.0
    %463 = vmatpush.xpose.msra.mxu0 0.0
    %464 = vmatpush.xpose.msra.mxu0 0.0
    %465 = vmatpush.xpose.msra.mxu0 0.0
    %466 = vmatpush.xpose.msra.mxu0 0.0
    %467 = vmatpush.xpose.msra.mxu0 0.0
    %468 = vmatpush.xpose.msra.mxu0 0.0
    %469 = vmatpush.xpose.msra.mxu0 0.0
    %470 = vmatpush.xpose.msra.mxu0 0.0
    %471 = vmatpush.xpose.msra.mxu0 0.0
    %472 = vmatpush.xpose.msra.mxu0 0.0
    %473 = vmatpush.xpose.msra.mxu0 0.0
    %474 = vmatpush.xpose.msra.mxu0 0.0
    %475 = vmatpush.xpose.msra.mxu0 %v458
    %476 = vmatmul.f32.gmra.mxu0 %v456
    %v477 = vpop.f32.mrf.mxu0
    %v478 = vadd.f32 %v44, %v477
    %479 = vdwg.mxu0
    %v480 = vsel %vm164, %v450, -inf
    %481 = vmax.xlane.f32.xlu0 %v480
    %v482 = vpop.xlane.xlu0 %481
    %v483 = vsel %vm164, %v478, -inf
    %484 = vmax.xlane.f32.xlu0 %v483
    %v485 = vpop.xlane.xlu0 %484
    %v486 = vsub.f32 %v450, %v482
    %v487 = vsub.f32 %v478, %v485
    %v488 = vmul.f32 %v486, 1.442695
    %v489 = vpow.pop %v488
    %v490 = vmul.f32 %v487, 1.442695
    %v491 = vpow.pop %v490
    %v492 = vsel %vm164, %v489, 0.0
    %493 = vadd.xlane.f32.xlu0 %v492
    %v494 = vpop.xlane.xlu0 %493
    %v495 = vsel %vm164, %v491, 0.0
    %496 = vadd.xlane.f32.xlu0 %v495
    %v497 = vpop.xlane.xlu0 %496
    %v498 = vrcp.pop %v494
    %v499 = vrcp.pop %v497
    %v500 = vmul.f32 %v489, %v498
    %v501 = vmul.f32 %v491, %v499
    %502 = vrot.lane.b32.xlu0 %v159, 48
    %v503 = vpop.permute.xlu0 %502
    %v506 = vsel %vm164, %v500, 0
    %508 = vmatpush.msra.mxu0 0.0
    %509 = vmatpush.msra.mxu0 0.0
    %510 = vmatpush.msra.mxu0 0.0
    %511 = vmatpush.msra.mxu0 0.0
    %512 = vmatpush.msra.mxu0 0.0
    %513 = vmatpush.msra.mxu0 0.0
    %514 = vmatpush.msra.mxu0 0.0
    %515 = vmatpush.msra.mxu0 0.0
    %516 = vmatpush.msra.mxu0 0.0
    %517 = vmatpush.msra.mxu0 0.0
    %518 = vmatpush.msra.mxu0 0.0
    %519 = vmatpush.msra.mxu0 0.0
    %520 = vmatpush.msra.mxu0 0.0
    %521 = vmatpush.msra.mxu0 0.0
    %522 = vmatpush.msra.mxu0 0.0
    %523 = vmatpush.msra.mxu0 %v503
    %524 = vmatmul.f32.gmra.mxu0 %v506
    %v525 = vpop.f32.mrf.mxu0
    %v526 = vadd.f32 0.0, %v525
    %527 = vdwg.mxu0
    %528 = vrot.lane.b32.xlu0 %v160, 48
    %v529 = vpop.permute.xlu0 %528
    %v532 = vsel %vm164, %v501, 0
    %534 = vmatpush.msra.mxu0 0.0
    %535 = vmatpush.msra.mxu0 0.0
    %536 = vmatpush.msra.mxu0 0.0
    %537 = vmatpush.msra.mxu0 0.0
    %538 = vmatpush.msra.mxu0 0.0
    %539 = vmatpush.msra.mxu0 0.0
    %540 = vmatpush.msra.mxu0 0.0
    %541 = vmatpush.msra.mxu0 0.0
    %542 = vmatpush.msra.mxu0 0.0
    %543 = vmatpush.msra.mxu0 0.0
    %544 = vmatpush.msra.mxu0 0.0
    %545 = vmatpush.msra.mxu0 0.0
    %546 = vmatpush.msra.mxu0 0.0
    %547 = vmatpush.msra.mxu0 0.0
    %548 = vmatpush.msra.mxu0 0.0
    %549 = vmatpush.msra.mxu0 %v529
    %550 = vmatmul.f32.gmra.mxu0 %v532
    %v551 = vpop.f32.mrf.mxu0
    %v552 = vadd.f32 0.0, %v551
    %553 = vdwg.mxu0
    %554 = vrot.lane.b32.xlu0 %v143, 104
    %v555 = vpop.permute.xlu0 %554
    %556 = vrot.lane.b32.xlu0 %v151, 72
    %v557 = vpop.permute.xlu0 %556
    %v558 = vsel %vm164, %v555, 0
    %v560 = vsel %vm164, %v557, 0
    %562 = vmatpush.xpose.msra.mxu0 0.0
    %563 = vmatpush.xpose.msra.mxu0 0.0
    %564 = vmatpush.xpose.msra.mxu0 0.0
    %565 = vmatpush.xpose.msra.mxu0 0.0
    %566 = vmatpush.xpose.msra.mxu0 0.0
    %567 = vmatpush.xpose.msra.mxu0 0.0
    %568 = vmatpush.xpose.msra.mxu0 0.0
    %569 = vmatpush.xpose.msra.mxu0 0.0
    %570 = vmatpush.xpose.msra.mxu0 0.0
    %571 = vmatpush.xpose.msra.mxu0 0.0
    %572 = vmatpush.xpose.msra.mxu0 0.0
    %573 = vmatpush.xpose.msra.mxu0 0.0
    %574 = vmatpush.xpose.msra.mxu0 0.0
    %575 = vmatpush.xpose.msra.mxu0 0.0
    %576 = vmatpush.xpose.msra.mxu0 0.0
    %577 = vmatpush.xpose.msra.mxu0 %v560
    %578 = vmatmul.f32.gmra.mxu0 %v558
    %v579 = vpop.f32.mrf.mxu0
    %v580 = vadd.f32 %v44, %v579
    %581 = vdwg.mxu0
    %582 = vrot.lane.b32.xlu0 %v144, 104
    %v583 = vpop.permute.xlu0 %582
    %584 = vrot.lane.b32.xlu0 %v152, 72
    %v585 = vpop.permute.xlu0 %584
    %v586 = vsel %vm164, %v583, 0
    %v588 = vsel %vm164, %v585, 0
    %590 = vmatpush.xpose.msra.mxu0 0.0
    %591 = vmatpush.xpose.msra.mxu0 0.0
    %592 = vmatpush.xpose.msra.mxu0 0.0
    %593 = vmatpush.xpose.msra.mxu0 0.0
    %594 = vmatpush.xpose.msra.mxu0 0.0
    %595 = vmatpush.xpose.msra.mxu0 0.0
    %596 = vmatpush.xpose.msra.mxu0 0.0
    %597 = vmatpush.xpose.msra.mxu0 0.0
    %598 = vmatpush.xpose.msra.mxu0 0.0
    %599 = vmatpush.xpose.msra.mxu0 0.0
    %600 = vmatpush.xpose.msra.mxu0 0.0
    %601 = vmatpush.xpose.msra.mxu0 0.0
    %602 = vmatpush.xpose.msra.mxu0 0.0
    %603 = vmatpush.xpose.msra.mxu0 0.0
    %604 = vmatpush.xpose.msra.mxu0 0.0
    %605 = vmatpush.xpose.msra.mxu0 %v588
    %606 = vmatmul.f32.gmra.mxu0 %v586
    %v607 = vpop.f32.mrf.mxu0
    %v608 = vadd.f32 %v44, %v607
    %609 = vdwg.mxu0
    %v610 = vsel %vm164, %v580, -inf
    %611 = vmax.xlane.f32.xlu0 %v610
    %v612 = vpop.xlane.xlu0 %611
    %v613 = vsel %vm164, %v608, -inf
    %614 = vmax.xlane.f32.xlu0 %v613
    %v615 = vpop.xlane.xlu0 %614
    %v616 = vsub.f32 %v580, %v612
    %v617 = vsub.f32 %v608, %v615
    %v618 = vmul.f32 %v616, 1.442695
    %v619 = vpow.pop %v618
    %v620 = vmul.f32 %v617, 1.442695
    %v621 = vpow.pop %v620
    %v622 = vsel %vm164, %v619, 0.0
    %623 = vadd.xlane.f32.xlu0 %v622
    %v624 = vpop.xlane.xlu0 %623
    %v625 = vsel %vm164, %v621, 0.0
    %626 = vadd.xlane.f32.xlu0 %v625
    %v627 = vpop.xlane.xlu0 %626
    %v628 = vrcp.pop %v624
    %v629 = vrcp.pop %v627
    %v630 = vmul.f32 %v619, %v628
    %v631 = vmul.f32 %v621, %v629
    %632 = vrot.lane.b32.xlu0 %v159, 40
    %v633 = vpop.permute.xlu0 %632
    %v636 = vsel %vm164, %v630, 0
    %638 = vmatpush.msra.mxu0 0.0
    %639 = vmatpush.msra.mxu0 0.0
    %640 = vmatpush.msra.mxu0 0.0
    %641 = vmatpush.msra.mxu0 0.0
    %642 = vmatpush.msra.mxu0 0.0
    %643 = vmatpush.msra.mxu0 0.0
    %644 = vmatpush.msra.mxu0 0.0
    %645 = vmatpush.msra.mxu0 0.0
    %646 = vmatpush.msra.mxu0 0.0
    %647 = vmatpush.msra.mxu0 0.0
    %648 = vmatpush.msra.mxu0 0.0
    %649 = vmatpush.msra.mxu0 0.0
    %650 = vmatpush.msra.mxu0 0.0
    %651 = vmatpush.msra.mxu0 0.0
    %652 = vmatpush.msra.mxu0 0.0
    %653 = vmatpush.msra.mxu0 %v633
    %654 = vmatmul.f32.gmra.mxu0 %v636
    %v655 = vpop.f32.mrf.mxu0
    %v656 = vadd.f32 0.0, %v655
    %657 = vdwg.mxu0
    %658 = vrot.lane.b32.xlu0 %v160, 40
    %v659 = vpop.permute.xlu0 %658
    %v662 = vsel %vm164, %v631, 0
    %664 = vmatpush.msra.mxu0 0.0
    %665 = vmatpush.msra.mxu0 0.0
    %666 = vmatpush.msra.mxu0 0.0
    %667 = vmatpush.msra.mxu0 0.0
    %668 = vmatpush.msra.mxu0 0.0
    %669 = vmatpush.msra.mxu0 0.0
    %670 = vmatpush.msra.mxu0 0.0
    %671 = vmatpush.msra.mxu0 0.0
    %672 = vmatpush.msra.mxu0 0.0
    %673 = vmatpush.msra.mxu0 0.0
    %674 = vmatpush.msra.mxu0 0.0
    %675 = vmatpush.msra.mxu0 0.0
    %676 = vmatpush.msra.mxu0 0.0
    %677 = vmatpush.msra.mxu0 0.0
    %678 = vmatpush.msra.mxu0 0.0
    %679 = vmatpush.msra.mxu0 %v659
    %680 = vmatmul.f32.gmra.mxu0 %v662
    %v681 = vpop.f32.mrf.mxu0
    %v682 = vadd.f32 0.0, %v681
    %683 = vdwg.mxu0
    %686 = vrot.lane.b32.xlu0 %v396, 8
    %v687 = vpop.permute.xlu0 %686
    %688 = vrot.lane.b32.xlu0 %v422, 8
    %v689 = vpop.permute.xlu0 %688
    %694 = vrot.lane.b32.xlu0 %v526, 16
    %v695 = vpop.permute.xlu0 %694
    %696 = vrot.lane.b32.xlu0 %v552, 16
    %v697 = vpop.permute.xlu0 %696
    %702 = vrot.lane.b32.xlu0 %v656, 24
    %v703 = vpop.permute.xlu0 %702
    %704 = vrot.lane.b32.xlu0 %v682, 24
    %v705 = vpop.permute.xlu0 %704
    %v708 = vsel %vm164, %v265, %v687
    %v709 = vsel %vm164, %v292, %v689
    %vm710 = vcmask 130048
    %v711 = vsel %vm710, %v708, %v695
    %v712 = vsel %vm710, %v709, %v697
    %vm713 = vcmask 195584
    %v714 = vsel %vm713, %v711, %v703
    %v715 = vsel %vm713, %v712, %v705
    %v716 = vpack.c.bf16 %v715, %v714
    %v717 = vld [vmem:[%s5] sm:$0xf]
    %v718 = vld [vmem:[%s5 + $0x4] sm:$0xf]
    %v719 = vld [vmem:[%s5 + $0x8] sm:$0xf]
    %v720 = vld [vmem:[%s5 + $0xc] sm:$0xf]
    %v721 = vld [vmem:[%s2 + $0x5] sm:$0x1]
    %v722 = vperm.slane %v721, 0
    %v727 = vunpack.c.l.b16 %v717
    %v728 = vunpack.c.l.b16 %v718
    %v729 = vunpack.c.l.b16 %v719
    %v730 = vunpack.c.l.b16 %v720
    %v731 = vpack.c.b16 %v728, %v727
    %v732 = vpack.c.b16 %v730, %v729
    %v736 = vsel %vm47, %v716, 0
    %738 = vmatpush.bf16.msra.mxu0 0
    %739 = vmatpush.bf16.msra.mxu0 0
    %740 = vmatpush.bf16.msra.mxu0 0
    %741 = vmatpush.bf16.msra.mxu0 0
    %742 = vmatpush.bf16.msra.mxu0 0
    %743 = vmatpush.bf16.msra.mxu0 0
    %744 = vmatpush.bf16.msra.mxu0 %v732
    %745 = vmatpush.bf16.msra.mxu0 %v731
    %746 = vmatmul.bf16.gmra.mxu0 %v736
    %v747 = vpop.f32.mrf.mxu0
    %v748 = vadd.f32 %v722, %v747
    %v749 = vpop.f32.mrf.mxu0
    %v750 = vadd.f32 %v722, %v749
    %751 = vdwg.mxu0
    %v752 = vadd.f32 %v37, %v748
    %v753 = vadd.f32 %v38, %v750
    %v754 = vld [vmem:[%s2 + $0x6] sm:$0x1]
    %v755 = vld [vmem:[%s2 + $0x7] sm:$0x1]
    %v756 = vsel %vm47, %v752, 0.0
    %757 = vadd.xlane.f32.xlu0 %v756
    %v758 = vpop.xlane.xlu0 %757
    %v759 = vsel %vm47, %v753, 0.0
    %760 = vadd.xlane.f32.xlu0 %v759
    %v761 = vpop.xlane.xlu0 %760
    %v762 = vmul.f32 %v758, %v60
    %v763 = vmul.f32 %v761, %v60
    %v764 = vsub.f32 %v752, %v762
    %v765 = vsub.f32 %v753, %v763
    %v766 = vmul.f32 %v764, %v764
    %v767 = vmul.f32 %v765, %v765
    %v768 = vsel %vm47, %v766, 0.0
    %769 = vadd.xlane.f32.xlu0 %v768
    %v770 = vpop.xlane.xlu0 %769
    %v771 = vsel %vm47, %v767, 0.0
    %772 = vadd.xlane.f32.xlu0 %v771
    %v773 = vpop.xlane.xlu0 %772
    %v774 = vmul.f32 %v770, %v60
    %v775 = vmul.f32 %v773, %v60
    %v776 = vadd.f32 %v774, 1e-05
    %v777 = vadd.f32 %v775, 1e-05
    %v778 = vrsqrt.pop %v776
    %v779 = vmul.f32 %v778, %v776
    %v780 = vmul.f32 %v779, %v778
    %v781 = vmul.f32 0.5, %v780
    %v782 = vsub.f32 1.5, %v781
    %v783 = vmul.f32 %v778, %v782
    %vm784 = vweird.f32 %v776
    %vm785 = vweird.f32 %v778
    %vm786 = vmor %vm784, %vm785
    %v787 = vsel %vm786, %v778, %v783
    %v788 = vrsqrt.pop %v777
    %v789 = vmul.f32 %v788, %v777
    %v790 = vmul.f32 %v789, %v788
    %v791 = vmul.f32 0.5, %v790
    %v792 = vsub.f32 1.5, %v791
    %v793 = vmul.f32 %v788, %v792
    %vm794 = vweird.f32 %v777
    %vm795 = vweird.f32 %v788
    %vm796 = vmor %vm794, %vm795
    %v797 = vsel %vm796, %v788, %v793
    %v798 = vmul.f32 %v764, %v787
    %v799 = vmul.f32 %v765, %v797
    %v800 = vperm.slane %v754, 0
    %v801 = vmul.f32 %v798, %v800
    %v802 = vmul.f32 %v799, %v800
    %v803 = vperm.slane %v755, 0
    %v804 = vadd.f32 %v801, %v803
    %v805 = vadd.f32 %v802, %v803
    %v806 = vpack.c.bf16 %v805, %v804
    %v807 = vld [vmem:[%s6] sm:$0xf]
    %v808 = vld [vmem:[%s6 + $0x4] sm:$0xf]
    %v809 = vld [vmem:[%s6 + $0x8] sm:$0xf]
    %v810 = vld [vmem:[%s6 + $0xc] sm:$0xf]
    %v811 = vld [vmem:[%s3] sm:$0x1]
    %v812 = vperm.slane %v811, 0
    %v817 = vunpack.c.l.b16 %v807
    %v818 = vunpack.c.l.b16 %v808
    %v819 = vunpack.c.l.b16 %v809
    %v820 = vunpack.c.l.b16 %v810
    %v821 = vpack.c.b16 %v818, %v817
    %v822 = vpack.c.b16 %v820, %v819
    %v826 = vsel %vm47, %v806, 0
    %828 = vmatpush.bf16.msra.mxu0 0
    %829 = vmatpush.bf16.msra.mxu0 0
    %830 = vmatpush.bf16.msra.mxu0 0
    %831 = vmatpush.bf16.msra.mxu0 0
    %832 = vmatpush.bf16.msra.mxu0 0
    %833 = vmatpush.bf16.msra.mxu0 0
    %834 = vmatpush.bf16.msra.mxu0 %v822
    %835 = vmatpush.bf16.msra.mxu0 %v821
    %836 = vmatmul.bf16.gmra.mxu0 %v826
    %v837 = vpop.f32.mrf.mxu0
    %v838 = vadd.f32 %v812, %v837
    %v839 = vpop.f32.mrf.mxu0
    %v840 = vadd.f32 %v812, %v839
    %841 = vdwg.mxu0
    %v842 = vmul.f32 %v838, 0.5
    %v843 = vmul.f32 %v840, 0.5
    %v844 = vmul.f32 %v838, 0.044715
    %v845 = vmul.f32 %v840, 0.044715
    %v846 = vmul.f32 %v844, %v838
    %v847 = vmul.f32 %v845, %v840
    %v848 = vmul.f32 %v846, %v838
    %v849 = vmul.f32 %v847, %v840
    %v850 = vadd.f32 %v838, %v848
    %v851 = vadd.f32 %v840, %v849
    %v852 = vmul.f32 %v850, 0.7978846
    %v853 = vmul.f32 %v851, 0.7978846
    %v854 = vtanh.pop %v852
    %v855 = vtanh.pop %v853
    %v856 = vadd.f32 %v854, 1.0
    %v857 = vadd.f32 %v855, 1.0
    %v858 = vmul.f32 %v842, %v856
    %v859 = vmul.f32 %v843, %v857
    %v860 = vpack.c.bf16 %v859, %v858
    %v861 = vld [vmem:[%s7] sm:$0xf]
    %v862 = vld [vmem:[%s7 + $0x4] sm:$0xf]
    %v863 = vld [vmem:[%s7 + $0x8] sm:$0xf]
    %v864 = vld [vmem:[%s7 + $0xc] sm:$0xf]
    %v865 = vld [vmem:[%s7 + $0x10] sm:$0xf]
    %v866 = vld [vmem:[%s7 + $0x14] sm:$0xf]
    %v867 = vld [vmem:[%s7 + $0x18] sm:$0xf]
    %v868 = vld [vmem:[%s7 + $0x1c] sm:$0xf]
    %v869 = vld [vmem:[%s7 + $0x20] sm:$0xf]
    %v870 = vld [vmem:[%s7 + $0x24] sm:$0xf]
    %v871 = vld [vmem:[%s7 + $0x28] sm:$0xf]
    %v872 = vld [vmem:[%s7 + $0x2c] sm:$0xf]
    %v873 = vld [vmem:[%s7 + $0x30] sm:$0xf]
    %v874 = vld [vmem:[%s7 + $0x34] sm:$0xf]
    %v875 = vld [vmem:[%s7 + $0x38] sm:$0xf]
    %v876 = vld [vmem:[%s7 + $0x3c] sm:$0xf]
    %v893 = vunpack.c.l.b16 %v861
    %v894 = vunpack.c.l.b16 %v862
    %v895 = vunpack.c.l.b16 %v863
    %v896 = vunpack.c.l.b16 %v864
    %v897 = vunpack.c.l.b16 %v865
    %v898 = vunpack.c.l.b16 %v866
    %v899 = vunpack.c.l.b16 %v867
    %v900 = vunpack.c.l.b16 %v868
    %v901 = vunpack.c.l.b16 %v869
    %v902 = vunpack.c.l.b16 %v870
    %v903 = vunpack.c.l.b16 %v871
    %v904 = vunpack.c.l.b16 %v872
    %v905 = vunpack.c.l.b16 %v873
    %v906 = vunpack.c.l.b16 %v874
    %v907 = vunpack.c.l.b16 %v875
    %v908 = vunpack.c.l.b16 %v876
    %v909 = vpack.c.b16 %v894, %v893
    %v910 = vpack.c.b16 %v896, %v895
    %v911 = vpack.c.b16 %v898, %v897
    %v912 = vpack.c.b16 %v900, %v899
    %v913 = vpack.c.b16 %v902, %v901
    %v914 = vpack.c.b16 %v904, %v903
    %v915 = vpack.c.b16 %v906, %v905
    %v916 = vpack.c.b16 %v908, %v907
    %925 = vmatpush.bf16.msra.mxu0 %v916
    %926 = vmatpush.bf16.msra.mxu0 %v915
    %927 = vmatpush.bf16.msra.mxu0 %v914
    %928 = vmatpush.bf16.msra.mxu0 %v913
    %929 = vmatpush.bf16.msra.mxu0 %v912
    %930 = vmatpush.bf16.msra.mxu0 %v911
    %931 = vmatpush.bf16.msra.mxu0 %v910
    %932 = vmatpush.bf16.msra.mxu0 %v909
    %933 = vmatmul.bf16.gmra.mxu0 %v860
    %v934 = vpop.f32.mrf.mxu0
    %v935 = vadd.f32 0.0, %v934
    %v936 = vpop.f32.mrf.mxu0
    %v937 = vadd.f32 0.0, %v936
    %938 = vdwg.mxu0
    %v939 = vadd.f32 %v752, %v935
    %v940 = vadd.f32 %v753, %v937
    %v941 = vld [vmem:[%s2 + $0x8] sm:$0x1]
    %v942 = vperm.slane %v941, 0
    %v943 = vadd.f32 %v939, %v942
    %v944 = vadd.f32 %v940, %v942
    %s945 = scalar_lea.vmem %s2, 16
    %v946 = vld [vmem:[%s945] sm:$0x1]
    %v947 = vld [vmem:[%s945 + $0x1] sm:$0x1]
    %v948 = vsel %vm47, %v943, 0.0
    %949 = vadd.xlane.f32.xlu0 %v948
    %v950 = vpop.xlane.xlu0 %949
    %v951 = vsel %vm47, %v944, 0.0
    %952 = vadd.xlane.f32.xlu0 %v951
    %v953 = vpop.xlane.xlu0 %952
    %v954 = vmul.f32 %v950, %v60
    %v955 = vmul.f32 %v953, %v60
    %v956 = vsub.f32 %v943, %v954
    %v957 = vsub.f32 %v944, %v955
    %v958 = vmul.f32 %v956, %v956
    %v959 = vmul.f32 %v957, %v957
    %v960 = vsel %vm47, %v958, 0.0
    %961 = vadd.xlane.f32.xlu0 %v960
    %v962 = vpop.xlane.xlu0 %961
    %v963 = vsel %vm47, %v959, 0.0
    %964 = vadd.xlane.f32.xlu0 %v963
    %v965 = vpop.xlane.xlu0 %964
    %v966 = vmul.f32 %v962, %v60
    %v967 = vmul.f32 %v965, %v60
    %v968 = vadd.f32 %v966, 1e-05
    %v969 = vadd.f32 %v967, 1e-05
    %v970 = vrsqrt.pop %v968
    %v971 = vmul.f32 %v970, %v968
    %v972 = vmul.f32 %v971, %v970
    %v973 = vmul.f32 0.5, %v972
    %v974 = vsub.f32 1.5, %v973
    %v975 = vmul.f32 %v970, %v974
    %vm976 = vweird.f32 %v968
    %vm977 = vweird.f32 %v970
    %vm978 = vmor %vm976, %vm977
    %v979 = vsel %vm978, %v970, %v975
    %v980 = vrsqrt.pop %v969
    %v981 = vmul.f32 %v980, %v969
    %v982 = vmul.f32 %v981, %v980
    %v983 = vmul.f32 0.5, %v982
    %v984 = vsub.f32 1.5, %v983
    %v985 = vmul.f32 %v980, %v984
    %vm986 = vweird.f32 %v969
    %vm987 = vweird.f32 %v980
    %vm988 = vmor %vm986, %vm987
    %v989 = vsel %vm988, %v980, %v985
    %v990 = vmul.f32 %v956, %v979
    %v991 = vmul.f32 %v957, %v989
    %v992 = vperm.slane %v946, 0
    %v993 = vmul.f32 %v990, %v992
    %v994 = vmul.f32 %v991, %v992
    %v995 = vperm.slane %v947, 0
    %v996 = vadd.f32 %v993, %v995
    %v997 = vadd.f32 %v994, %v995
    %v998 = vpack.c.bf16 %v997, %v996
    %s999 = scalar_lea.vmem %s4, 16
    %v1000 = vld [vmem:[%s999] sm:$0xf]
    %v1001 = vld [vmem:[%s999 + $0x4] sm:$0xf]
    %v1002 = vld [vmem:[%s999 + $0x8] sm:$0xf]
    %v1003 = vld [vmem:[%s999 + $0xc] sm:$0xf]
    %v1008 = vunpack.c.l.b16 %v1000
    %v1009 = vunpack.c.l.b16 %v1001
    %v1010 = vunpack.c.l.b16 %v1002
    %v1011 = vunpack.c.l.b16 %v1003
    %v1012 = vpack.c.b16 %v1009, %v1008
    %v1013 = vpack.c.b16 %v1011, %v1010
    %v1017 = vsel %vm47, %v998, 0
    %1019 = vmatpush.bf16.msra.mxu0 0
    %1020 = vmatpush.bf16.msra.mxu0 0
    %1021 = vmatpush.bf16.msra.mxu0 0
    %1022 = vmatpush.bf16.msra.mxu0 0
    %1023 = vmatpush.bf16.msra.mxu0 0
    %1024 = vmatpush.bf16.msra.mxu0 0
    %1025 = vmatpush.bf16.msra.mxu0 %v1013
    %1026 = vmatpush.bf16.msra.mxu0 %v1012
    %1027 = vmatmul.bf16.gmra.mxu0 %v1017
    %v1028 = vpop.f32.mrf.mxu0
    %v1029 = vadd.f32 0.0, %v1028
    %v1030 = vpop.f32.mrf.mxu0
    %v1031 = vadd.f32 0.0, %v1030
    %1032 = vdwg.mxu0
    %v1033 = vld [vmem:[%s945 + $0x2] sm:$0x1]
    %v1034 = vperm.slane %v1033, 0
    %v1035 = vadd.f32 %v1029, %v1034
    %v1036 = vadd.f32 %v1031, %v1034
    %v1037 = vmul.f32 %v1035, 0.35355338
    %v1038 = vmul.f32 %v1036, 0.35355338
    %v1039 = vld [vmem:[%s945 + $0x3] sm:$0x1]
    %v1040 = vperm.slane %v1039, 0
    %1042 = vrot.lane.b32.xlu0 %v1040, 32
    %v1043 = vpop.permute.xlu0 %1042
    %v1045 = vadd.f32 %v1029, %v1043
    %v1046 = vadd.f32 %v1031, %v1043
    %v1047 = vld [vmem:[%s945 + $0x4] sm:$0x1]
    %v1048 = vperm.slane %v1047, 0
    %1050 = vrot.lane.b32.xlu0 %v1048, 64
    %v1051 = vpop.permute.xlu0 %1050
    %v1053 = vadd.f32 %v1029, %v1051
    %v1054 = vadd.f32 %v1031, %v1051
    %1056 = vrot.lane.b32.xlu0 %v1045, 96
    %v1057 = vpop.permute.xlu0 %1056
    %v1059 = vsel %vm164, %v1037, 0
    %v1061 = vsel %vm164, %v1057, 0
    %1063 = vmatpush.xpose.msra.mxu0 0.0
    %1064 = vmatpush.xpose.msra.mxu0 0.0
    %1065 = vmatpush.xpose.msra.mxu0 0.0
    %1066 = vmatpush.xpose.msra.mxu0 0.0
    %1067 = vmatpush.xpose.msra.mxu0 0.0
    %1068 = vmatpush.xpose.msra.mxu0 0.0
    %1069 = vmatpush.xpose.msra.mxu0 0.0
    %1070 = vmatpush.xpose.msra.mxu0 0.0
    %1071 = vmatpush.xpose.msra.mxu0 0.0
    %1072 = vmatpush.xpose.msra.mxu0 0.0
    %1073 = vmatpush.xpose.msra.mxu0 0.0
    %1074 = vmatpush.xpose.msra.mxu0 0.0
    %1075 = vmatpush.xpose.msra.mxu0 0.0
    %1076 = vmatpush.xpose.msra.mxu0 0.0
    %1077 = vmatpush.xpose.msra.mxu0 0.0
    %1078 = vmatpush.xpose.msra.mxu0 %v1061
    %1079 = vmatmul.f32.gmra.mxu0 %v1059
    %v1080 = vpop.f32.mrf.mxu0
    %v1081 = vadd.f32 %v44, %v1080
    %1082 = vdwg.mxu0
    %1084 = vrot.lane.b32.xlu0 %v1046, 96
    %v1085 = vpop.permute.xlu0 %1084
    %v1087 = vsel %vm164, %v1038, 0
    %v1089 = vsel %vm164, %v1085, 0
    %1091 = vmatpush.xpose.msra.mxu0 0.0
    %1092 = vmatpush.xpose.msra.mxu0 0.0
    %1093 = vmatpush.xpose.msra.mxu0 0.0
    %1094 = vmatpush.xpose.msra.mxu0 0.0
    %1095 = vmatpush.xpose.msra.mxu0 0.0
    %1096 = vmatpush.xpose.msra.mxu0 0.0
    %1097 = vmatpush.xpose.msra.mxu0 0.0
    %1098 = vmatpush.xpose.msra.mxu0 0.0
    %1099 = vmatpush.xpose.msra.mxu0 0.0
    %1100 = vmatpush.xpose.msra.mxu0 0.0
    %1101 = vmatpush.xpose.msra.mxu0 0.0
    %1102 = vmatpush.xpose.msra.mxu0 0.0
    %1103 = vmatpush.xpose.msra.mxu0 0.0
    %1104 = vmatpush.xpose.msra.mxu0 0.0
    %1105 = vmatpush.xpose.msra.mxu0 0.0
    %1106 = vmatpush.xpose.msra.mxu0 %v1089
    %1107 = vmatmul.f32.gmra.mxu0 %v1087
    %v1108 = vpop.f32.mrf.mxu0
    %v1109 = vadd.f32 %v44, %v1108
    %1110 = vdwg.mxu0
    %v1111 = vsel %vm164, %v1081, -inf
    %1112 = vmax.xlane.f32.xlu0 %v1111
    %v1113 = vpop.xlane.xlu0 %1112
    %v1114 = vsel %vm164, %v1109, -inf
    %1115 = vmax.xlane.f32.xlu0 %v1114
    %v1116 = vpop.xlane.xlu0 %1115
    %v1117 = vsub.f32 %v1081, %v1113
    %v1118 = vsub.f32 %v1109, %v1116
    %v1119 = vmul.f32 %v1117, 1.442695
    %v1120 = vpow.pop %v1119
    %v1121 = vmul.f32 %v1118, 1.442695
    %v1122 = vpow.pop %v1121
    %v1123 = vsel %vm164, %v1120, 0.0
    %1124 = vadd.xlane.f32.xlu0 %v1123
    %v1125 = vpop.xlane.xlu0 %1124
    %v1126 = vsel %vm164, %v1122, 0.0
    %1127 = vadd.xlane.f32.xlu0 %v1126
    %v1128 = vpop.xlane.xlu0 %1127
    %v1129 = vrcp.pop %v1125
    %v1130 = vrcp.pop %v1128
    %v1131 = vmul.f32 %v1120, %v1129
    %v1132 = vmul.f32 %v1122, %v1130
    %1134 = vrot.lane.b32.xlu0 %v1053, 64
    %v1135 = vpop.permute.xlu0 %1134
    %v1138 = vsel %vm164, %v1131, 0
    %1140 = vmatpush.msra.mxu0 0.0
    %1141 = vmatpush.msra.mxu0 0.0
    %1142 = vmatpush.msra.mxu0 0.0
    %1143 = vmatpush.msra.mxu0 0.0
    %1144 = vmatpush.msra.mxu0 0.0
    %1145 = vmatpush.msra.mxu0 0.0
    %1146 = vmatpush.msra.mxu0 0.0
    %1147 = vmatpush.msra.mxu0 0.0
    %1148 = vmatpush.msra.mxu0 0.0
    %1149 = vmatpush.msra.mxu0 0.0
    %1150 = vmatpush.msra.mxu0 0.0
    %1151 = vmatpush.msra.mxu0 0.0
    %1152 = vmatpush.msra.mxu0 0.0
    %1153 = vmatpush.msra.mxu0 0.0
    %1154 = vmatpush.msra.mxu0 0.0
    %1155 = vmatpush.msra.mxu0 %v1135
    %1156 = vmatmul.f32.gmra.mxu0 %v1138
    %v1157 = vpop.f32.mrf.mxu0
    %v1158 = vadd.f32 0.0, %v1157
    %1159 = vdwg.mxu0
    %1161 = vrot.lane.b32.xlu0 %v1054, 64
    %v1162 = vpop.permute.xlu0 %1161
    %v1165 = vsel %vm164, %v1132, 0
    %1167 = vmatpush.msra.mxu0 0.0
    %1168 = vmatpush.msra.mxu0 0.0
    %1169 = vmatpush.msra.mxu0 0.0
    %1170 = vmatpush.msra.mxu0 0.0
    %1171 = vmatpush.msra.mxu0 0.0
    %1172 = vmatpush.msra.mxu0 0.0
    %1173 = vmatpush.msra.mxu0 0.0
    %1174 = vmatpush.msra.mxu0 0.0
    %1175 = vmatpush.msra.mxu0 0.0
    %1176 = vmatpush.msra.mxu0 0.0
    %1177 = vmatpush.msra.mxu0 0.0
    %1178 = vmatpush.msra.mxu0 0.0
    %1179 = vmatpush.msra.mxu0 0.0
    %1180 = vmatpush.msra.mxu0 0.0
    %1181 = vmatpush.msra.mxu0 0.0
    %1182 = vmatpush.msra.mxu0 %v1162
    %1183 = vmatmul.f32.gmra.mxu0 %v1165
    %v1184 = vpop.f32.mrf.mxu0
    %v1185 = vadd.f32 0.0, %v1184
    %1186 = vdwg.mxu0
    %1187 = vrot.lane.b32.xlu0 %v1037, 120
    %v1188 = vpop.permute.xlu0 %1187
    %1189 = vrot.lane.b32.xlu0 %v1045, 88
    %v1190 = vpop.permute.xlu0 %1189
    %v1191 = vsel %vm164, %v1188, 0
    %v1193 = vsel %vm164, %v1190, 0
    %1195 = vmatpush.xpose.msra.mxu0 0.0
    %1196 = vmatpush.xpose.msra.mxu0 0.0
    %1197 = vmatpush.xpose.msra.mxu0 0.0
    %1198 = vmatpush.xpose.msra.mxu0 0.0
    %1199 = vmatpush.xpose.msra.mxu0 0.0
    %1200 = vmatpush.xpose.msra.mxu0 0.0
    %1201 = vmatpush.xpose.msra.mxu0 0.0
    %1202 = vmatpush.xpose.msra.mxu0 0.0
    %1203 = vmatpush.xpose.msra.mxu0 0.0
    %1204 = vmatpush.xpose.msra.mxu0 0.0
    %1205 = vmatpush.xpose.msra.mxu0 0.0
    %1206 = vmatpush.xpose.msra.mxu0 0.0
    %1207 = vmatpush.xpose.msra.mxu0 0.0
    %1208 = vmatpush.xpose.msra.mxu0 0.0
    %1209 = vmatpush.xpose.msra.mxu0 0.0
    %1210 = vmatpush.xpose.msra.mxu0 %v1193
    %1211 = vmatmul.f32.gmra.mxu0 %v1191
    %v1212 = vpop.f32.mrf.mxu0
    %v1213 = vadd.f32 %v44, %v1212
    %1214 = vdwg.mxu0
    %1215 = vrot.lane.b32.xlu0 %v1038, 120
    %v1216 = vpop.permute.xlu0 %1215
    %1217 = vrot.lane.b32.xlu0 %v1046, 88
    %v1218 = vpop.permute.xlu0 %1217
    %v1219 = vsel %vm164, %v1216, 0
    %v1221 = vsel %vm164, %v1218, 0
    %1223 = vmatpush.xpose.msra.mxu0 0.0
    %1224 = vmatpush.xpose.msra.mxu0 0.0
    %1225 = vmatpush.xpose.msra.mxu0 0.0
    %1226 = vmatpush.xpose.msra.mxu0 0.0
    %1227 = vmatpush.xpose.msra.mxu0 0.0
    %1228 = vmatpush.xpose.msra.mxu0 0.0
    %1229 = vmatpush.xpose.msra.mxu0 0.0
    %1230 = vmatpush.xpose.msra.mxu0 0.0
    %1231 = vmatpush.xpose.msra.mxu0 0.0
    %1232 = vmatpush.xpose.msra.mxu0 0.0
    %1233 = vmatpush.xpose.msra.mxu0 0.0
    %1234 = vmatpush.xpose.msra.mxu0 0.0
    %1235 = vmatpush.xpose.msra.mxu0 0.0
    %1236 = vmatpush.xpose.msra.mxu0 0.0
    %1237 = vmatpush.xpose.msra.mxu0 0.0
    %1238 = vmatpush.xpose.msra.mxu0 %v1221
    %1239 = vmatmul.f32.gmra.mxu0 %v1219
    %v1240 = vpop.f32.mrf.mxu0
    %v1241 = vadd.f32 %v44, %v1240
    %1242 = vdwg.mxu0
    %v1243 = vsel %vm164, %v1213, -inf
    %1244 = vmax.xlane.f32.xlu0 %v1243
    %v1245 = vpop.xlane.xlu0 %1244
    %v1246 = vsel %vm164, %v1241, -inf
    %1247 = vmax.xlane.f32.xlu0 %v1246
    %v1248 = vpop.xlane.xlu0 %1247
    %v1249 = vsub.f32 %v1213, %v1245
    %v1250 = vsub.f32 %v1241, %v1248
    %v1251 = vmul.f32 %v1249, 1.442695
    %v1252 = vpow.pop %v1251
    %v1253 = vmul.f32 %v1250, 1.442695
    %v1254 = vpow.pop %v1253
    %v1255 = vsel %vm164, %v1252, 0.0
    %1256 = vadd.xlane.f32.xlu0 %v1255
    %v1257 = vpop.xlane.xlu0 %1256
    %v1258 = vsel %vm164, %v1254, 0.0
    %1259 = vadd.xlane.f32.xlu0 %v1258
    %v1260 = vpop.xlane.xlu0 %1259
    %v1261 = vrcp.pop %v1257
    %v1262 = vrcp.pop %v1260
    %v1263 = vmul.f32 %v1252, %v1261
    %v1264 = vmul.f32 %v1254, %v1262
    %1265 = vrot.lane.b32.xlu0 %v1053, 56
    %v1266 = vpop.permute.xlu0 %1265
    %v1269 = vsel %vm164, %v1263, 0
    %1271 = vmatpush.msra.mxu0 0.0
    %1272 = vmatpush.msra.mxu0 0.0
    %1273 = vmatpush.msra.mxu0 0.0
    %1274 = vmatpush.msra.mxu0 0.0
    %1275 = vmatpush.msra.mxu0 0.0
    %1276 = vmatpush.msra.mxu0 0.0
    %1277 = vmatpush.msra.mxu0 0.0
    %1278 = vmatpush.msra.mxu0 0.0
    %1279 = vmatpush.msra.mxu0 0.0
    %1280 = vmatpush.msra.mxu0 0.0
    %1281 = vmatpush.msra.mxu0 0.0
    %1282 = vmatpush.msra.mxu0 0.0
    %1283 = vmatpush.msra.mxu0 0.0
    %1284 = vmatpush.msra.mxu0 0.0
    %1285 = vmatpush.msra.mxu0 0.0
    %1286 = vmatpush.msra.mxu0 %v1266
    %1287 = vmatmul.f32.gmra.mxu0 %v1269
    %v1288 = vpop.f32.mrf.mxu0
    %v1289 = vadd.f32 0.0, %v1288
    %1290 = vdwg.mxu0
    %1291 = vrot.lane.b32.xlu0 %v1054, 56
    %v1292 = vpop.permute.xlu0 %1291
    %v1295 = vsel %vm164, %v1264, 0
    %1297 = vmatpush.msra.mxu0 0.0
    %1298 = vmatpush.msra.mxu0 0.0
    %1299 = vmatpush.msra.mxu0 0.0
    %1300 = vmatpush.msra.mxu0 0.0
    %1301 = vmatpush.msra.mxu0 0.0
    %1302 = vmatpush.msra.mxu0 0.0
    %1303 = vmatpush.msra.mxu0 0.0
    %1304 = vmatpush.msra.mxu0 0.0
    %1305 = vmatpush.msra.mxu0 0.0
    %1306 = vmatpush.msra.mxu0 0.0
    %1307 = vmatpush.msra.mxu0 0.0
    %1308 = vmatpush.msra.mxu0 0.0
    %1309 = vmatpush.msra.mxu0 0.0
    %1310 = vmatpush.msra.mxu0 0.0
    %1311 = vmatpush.msra.mxu0 0.0
    %1312 = vmatpush.msra.mxu0 %v1292
    %1313 = vmatmul.f32.gmra.mxu0 %v1295
    %v1314 = vpop.f32.mrf.mxu0
    %v1315 = vadd.f32 0.0, %v1314
    %1316 = vdwg.mxu0
    %1317 = vrot.lane.b32.xlu0 %v1037, 112
    %v1318 = vpop.permute.xlu0 %1317
    %1319 = vrot.lane.b32.xlu0 %v1045, 80
    %v1320 = vpop.permute.xlu0 %1319
    %v1321 = vsel %vm164, %v1318, 0
    %v1323 = vsel %vm164, %v1320, 0
    %1325 = vmatpush.xpose.msra.mxu0 0.0
    %1326 = vmatpush.xpose.msra.mxu0 0.0
    %1327 = vmatpush.xpose.msra.mxu0 0.0
    %1328 = vmatpush.xpose.msra.mxu0 0.0
    %1329 = vmatpush.xpose.msra.mxu0 0.0
    %1330 = vmatpush.xpose.msra.mxu0 0.0
    %1331 = vmatpush.xpose.msra.mxu0 0.0
    %1332 = vmatpush.xpose.msra.mxu0 0.0
    %1333 = vmatpush.xpose.msra.mxu0 0.0
    %1334 = vmatpush.xpose.msra.mxu0 0.0
    %1335 = vmatpush.xpose.msra.mxu0 0.0
    %1336 = vmatpush.xpose.msra.mxu0 0.0
    %1337 = vmatpush.xpose.msra.mxu0 0.0
    %1338 = vmatpush.xpose.msra.mxu0 0.0
    %1339 = vmatpush.xpose.msra.mxu0 0.0
    %1340 = vmatpush.xpose.msra.mxu0 %v1323
    %1341 = vmatmul.f32.gmra.mxu0 %v1321
    %v1342 = vpop.f32.mrf.mxu0
    %v1343 = vadd.f32 %v44, %v1342
    %1344 = vdwg.mxu0
    %1345 = vrot.lane.b32.xlu0 %v1038, 112
    %v1346 = vpop.permute.xlu0 %1345
    %1347 = vrot.lane.b32.xlu0 %v1046, 80
    %v1348 = vpop.permute.xlu0 %1347
    %v1349 = vsel %vm164, %v1346, 0
    %v1351 = vsel %vm164, %v1348, 0
    %1353 = vmatpush.xpose.msra.mxu0 0.0
    %1354 = vmatpush.xpose.msra.mxu0 0.0
    %1355 = vmatpush.xpose.msra.mxu0 0.0
    %1356 = vmatpush.xpose.msra.mxu0 0.0
    %1357 = vmatpush.xpose.msra.mxu0 0.0
    %1358 = vmatpush.xpose.msra.mxu0 0.0
    %1359 = vmatpush.xpose.msra.mxu0 0.0
    %1360 = vmatpush.xpose.msra.mxu0 0.0
    %1361 = vmatpush.xpose.msra.mxu0 0.0
    %1362 = vmatpush.xpose.msra.mxu0 0.0
    %1363 = vmatpush.xpose.msra.mxu0 0.0
    %1364 = vmatpush.xpose.msra.mxu0 0.0
    %1365 = vmatpush.xpose.msra.mxu0 0.0
    %1366 = vmatpush.xpose.msra.mxu0 0.0
    %1367 = vmatpush.xpose.msra.mxu0 0.0
    %1368 = vmatpush.xpose.msra.mxu0 %v1351
    %1369 = vmatmul.f32.gmra.mxu0 %v1349
    %v1370 = vpop.f32.mrf.mxu0
    %v1371 = vadd.f32 %v44, %v1370
    %1372 = vdwg.mxu0
    %v1373 = vsel %vm164, %v1343, -inf
    %1374 = vmax.xlane.f32.xlu0 %v1373
    %v1375 = vpop.xlane.xlu0 %1374
    %v1376 = vsel %vm164, %v1371, -inf
    %1377 = vmax.xlane.f32.xlu0 %v1376
    %v1378 = vpop.xlane.xlu0 %1377
    %v1379 = vsub.f32 %v1343, %v1375
    %v1380 = vsub.f32 %v1371, %v1378
    %v1381 = vmul.f32 %v1379, 1.442695
    %v1382 = vpow.pop %v1381
    %v1383 = vmul.f32 %v1380, 1.442695
    %v1384 = vpow.pop %v1383
    %v1385 = vsel %vm164, %v1382, 0.0
    %1386 = vadd.xlane.f32.xlu0 %v1385
    %v1387 = vpop.xlane.xlu0 %1386
    %v1388 = vsel %vm164, %v1384, 0.0
    %1389 = vadd.xlane.f32.xlu0 %v1388
    %v1390 = vpop.xlane.xlu0 %1389
    %v1391 = vrcp.pop %v1387
    %v1392 = vrcp.pop %v1390
    %v1393 = vmul.f32 %v1382, %v1391
    %v1394 = vmul.f32 %v1384, %v1392
    %1395 = vrot.lane.b32.xlu0 %v1053, 48
    %v1396 = vpop.permute.xlu0 %1395
    %v1399 = vsel %vm164, %v1393, 0
    %1401 = vmatpush.msra.mxu0 0.0
    %1402 = vmatpush.msra.mxu0 0.0
    %1403 = vmatpush.msra.mxu0 0.0
    %1404 = vmatpush.msra.mxu0 0.0
    %1405 = vmatpush.msra.mxu0 0.0
    %1406 = vmatpush.msra.mxu0 0.0
    %1407 = vmatpush.msra.mxu0 0.0
    %1408 = vmatpush.msra.mxu0 0.0
    %1409 = vmatpush.msra.mxu0 0.0
    %1410 = vmatpush.msra.mxu0 0.0
    %1411 = vmatpush.msra.mxu0 0.0
    %1412 = vmatpush.msra.mxu0 0.0
    %1413 = vmatpush.msra.mxu0 0.0
    %1414 = vmatpush.msra.mxu0 0.0
    %1415 = vmatpush.msra.mxu0 0.0
    %1416 = vmatpush.msra.mxu0 %v1396
    %1417 = vmatmul.f32.gmra.mxu0 %v1399
    %v1418 = vpop.f32.mrf.mxu0
    %v1419 = vadd.f32 0.0, %v1418
    %1420 = vdwg.mxu0
    %1421 = vrot.lane.b32.xlu0 %v1054, 48
    %v1422 = vpop.permute.xlu0 %1421
    %v1425 = vsel %vm164, %v1394, 0
    %1427 = vmatpush.msra.mxu0 0.0
    %1428 = vmatpush.msra.mxu0 0.0
    %1429 = vmatpush.msra.mxu0 0.0
    %1430 = vmatpush.msra.mxu0 0.0
    %1431 = vmatpush.msra.mxu0 0.0
    %1432 = vmatpush.msra.mxu0 0.0
    %1433 = vmatpush.msra.mxu0 0.0
    %1434 = vmatpush.msra.mxu0 0.0
    %1435 = vmatpush.msra.mxu0 0.0
    %1436 = vmatpush.msra.mxu0 0.0
    %1437 = vmatpush.msra.mxu0 0.0
    %1438 = vmatpush.msra.mxu0 0.0
    %1439 = vmatpush.msra.mxu0 0.0
    %1440 = vmatpush.msra.mxu0 0.0
    %1441 = vmatpush.msra.mxu0 0.0
    %1442 = vmatpush.msra.mxu0 %v1422
    %1443 = vmatmul.f32.gmra.mxu0 %v1425
    %v1444 = vpop.f32.mrf.mxu0
    %v1445 = vadd.f32 0.0, %v1444
    %1446 = vdwg.mxu0
    %1447 = vrot.lane.b32.xlu0 %v1037, 104
    %v1448 = vpop.permute.xlu0 %1447
    %1449 = vrot.lane.b32.xlu0 %v1045, 72
    %v1450 = vpop.permute.xlu0 %1449
    %v1451 = vsel %vm164, %v1448, 0
    %v1453 = vsel %vm164, %v1450, 0
    %1455 = vmatpush.xpose.msra.mxu0 0.0
    %1456 = vmatpush.xpose.msra.mxu0 0.0
    %1457 = vmatpush.xpose.msra.mxu0 0.0
    %1458 = vmatpush.xpose.msra.mxu0 0.0
    %1459 = vmatpush.xpose.msra.mxu0 0.0
    %1460 = vmatpush.xpose.msra.mxu0 0.0
    %1461 = vmatpush.xpose.msra.mxu0 0.0
    %1462 = vmatpush.xpose.msra.mxu0 0.0
    %1463 = vmatpush.xpose.msra.mxu0 0.0
    %1464 = vmatpush.xpose.msra.mxu0 0.0
    %1465 = vmatpush.xpose.msra.mxu0 0.0
    %1466 = vmatpush.xpose.msra.mxu0 0.0
    %1467 = vmatpush.xpose.msra.mxu0 0.0
    %1468 = vmatpush.xpose.msra.mxu0 0.0
    %1469 = vmatpush.xpose.msra.mxu0 0.0
    %1470 = vmatpush.xpose.msra.mxu0 %v1453
    %1471 = vmatmul.f32.gmra.mxu0 %v1451
    %v1472 = vpop.f32.mrf.mxu0
    %v1473 = vadd.f32 %v44, %v1472
    %1474 = vdwg.mxu0
    %1475 = vrot.lane.b32.xlu0 %v1038, 104
    %v1476 = vpop.permute.xlu0 %1475
    %1477 = vrot.lane.b32.xlu0 %v1046, 72
    %v1478 = vpop.permute.xlu0 %1477
    %v1479 = vsel %vm164, %v1476, 0
    %v1481 = vsel %vm164, %v1478, 0
    %1483 = vmatpush.xpose.msra.mxu0 0.0
    %1484 = vmatpush.xpose.msra.mxu0 0.0
    %1485 = vmatpush.xpose.msra.mxu0 0.0
    %1486 = vmatpush.xpose.msra.mxu0 0.0
    %1487 = vmatpush.xpose.msra.mxu0 0.0
    %1488 = vmatpush.xpose.msra.mxu0 0.0
    %1489 = vmatpush.xpose.msra.mxu0 0.0
    %1490 = vmatpush.xpose.msra.mxu0 0.0
    %1491 = vmatpush.xpose.msra.mxu0 0.0
    %1492 = vmatpush.xpose.msra.mxu0 0.0
    %1493 = vmatpush.xpose.msra.mxu0 0.0
    %1494 = vmatpush.xpose.msra.mxu0 0.0
    %1495 = vmatpush.xpose.msra.mxu0 0.0
    %1496 = vmatpush.xpose.msra.mxu0 0.0
    %1497 = vmatpush.xpose.msra.mxu0 0.0
    %1498 = vmatpush.xpose.msra.mxu0 %v1481
    %1499 = vmatmul.f32.gmra.mxu0 %v1479
    %v1500 = vpop.f32.mrf.mxu0
    %v1501 = vadd.f32 %v44, %v1500
    %1502 = vdwg.mxu0
    %v1503 = vsel %vm164, %v1473, -inf
    %1504 = vmax.xlane.f32.xlu0 %v1503
    %v1505 = vpop.xlane.xlu0 %1504
    %v1506 = vsel %vm164, %v1501, -inf
    %1507 = vmax.xlane.f32.xlu0 %v1506
    %v1508 = vpop.xlane.xlu0 %1507
    %v1509 = vsub.f32 %v1473, %v1505
    %v1510 = vsub.f32 %v1501, %v1508
    %v1511 = vmul.f32 %v1509, 1.442695
    %v1512 = vpow.pop %v1511
    %v1513 = vmul.f32 %v1510, 1.442695
    %v1514 = vpow.pop %v1513
    %v1515 = vsel %vm164, %v1512, 0.0
    %1516 = vadd.xlane.f32.xlu0 %v1515
    %v1517 = vpop.xlane.xlu0 %1516
    %v1518 = vsel %vm164, %v1514, 0.0
    %1519 = vadd.xlane.f32.xlu0 %v1518
    %v1520 = vpop.xlane.xlu0 %1519
    %v1521 = vrcp.pop %v1517
    %v1522 = vrcp.pop %v1520
    %v1523 = vmul.f32 %v1512, %v1521
    %v1524 = vmul.f32 %v1514, %v1522
    %1525 = vrot.lane.b32.xlu0 %v1053, 40
    %v1526 = vpop.permute.xlu0 %1525
    %v1529 = vsel %vm164, %v1523, 0
    %1531 = vmatpush.msra.mxu0 0.0
    %1532 = vmatpush.msra.mxu0 0.0
    %1533 = vmatpush.msra.mxu0 0.0
    %1534 = vmatpush.msra.mxu0 0.0
    %1535 = vmatpush.msra.mxu0 0.0
    %1536 = vmatpush.msra.mxu0 0.0
    %1537 = vmatpush.msra.mxu0 0.0
    %1538 = vmatpush.msra.mxu0 0.0
    %1539 = vmatpush.msra.mxu0 0.0
    %1540 = vmatpush.msra.mxu0 0.0
    %1541 = vmatpush.msra.mxu0 0.0
    %1542 = vmatpush.msra.mxu0 0.0
    %1543 = vmatpush.msra.mxu0 0.0
    %1544 = vmatpush.msra.mxu0 0.0
    %1545 = vmatpush.msra.mxu0 0.0
    %1546 = vmatpush.msra.mxu0 %v1526
    %1547 = vmatmul.f32.gmra.mxu0 %v1529
    %v1548 = vpop.f32.mrf.mxu0
    %v1549 = vadd.f32 0.0, %v1548
    %1550 = vdwg.mxu0
    %1551 = vrot.lane.b32.xlu0 %v1054, 40
    %v1552 = vpop.permute.xlu0 %1551
    %v1555 = vsel %vm164, %v1524, 0
    %1557 = vmatpush.msra.mxu0 0.0
    %1558 = vmatpush.msra.mxu0 0.0
    %1559 = vmatpush.msra.mxu0 0.0
    %1560 = vmatpush.msra.mxu0 0.0
    %1561 = vmatpush.msra.mxu0 0.0
    %1562 = vmatpush.msra.mxu0 0.0
    %1563 = vmatpush.msra.mxu0 0.0
    %1564 = vmatpush.msra.mxu0 0.0
    %1565 = vmatpush.msra.mxu0 0.0
    %1566 = vmatpush.msra.mxu0 0.0
    %1567 = vmatpush.msra.mxu0 0.0
    %1568 = vmatpush.msra.mxu0 0.0
    %1569 = vmatpush.msra.mxu0 0.0
    %1570 = vmatpush.msra.mxu0 0.0
    %1571 = vmatpush.msra.mxu0 0.0
    %1572 = vmatpush.msra.mxu0 %v1552
    %1573 = vmatmul.f32.gmra.mxu0 %v1555
    %v1574 = vpop.f32.mrf.mxu0
    %v1575 = vadd.f32 0.0, %v1574
    %1576 = vdwg.mxu0
    %1579 = vrot.lane.b32.xlu0 %v1289, 8
    %v1580 = vpop.permute.xlu0 %1579
    %1581 = vrot.lane.b32.xlu0 %v1315, 8
    %v1582 = vpop.permute.xlu0 %1581
    %1587 = vrot.lane.b32.xlu0 %v1419, 16
    %v1588 = vpop.permute.xlu0 %1587
    %1589 = vrot.lane.b32.xlu0 %v1445, 16
    %v1590 = vpop.permute.xlu0 %1589
    %1595 = vrot.lane.b32.xlu0 %v1549, 24
    %v1596 = vpop.permute.xlu0 %1595
    %1597 = vrot.lane.b32.xlu0 %v1575, 24
    %v1598 = vpop.permute.xlu0 %1597
    %v1601 = vsel %vm164, %v1158, %v1580
    %v1602 = vsel %vm164, %v1185, %v1582
    %v1603 = vsel %vm710, %v1601, %v1588
    %v1604 = vsel %vm710, %v1602, %v1590
    %v1605 = vsel %vm713, %v1603, %v1596
    %v1606 = vsel %vm713, %v1604, %v1598
    %v1607 = vpack.c.bf16 %v1606, %v1605
    %s1608 = scalar_lea.vmem %s5, 16
    %v1609 = vld [vmem:[%s1608] sm:$0xf]
    %v1610 = vld [vmem:[%s1608 + $0x4] sm:$0xf]
    %v1611 = vld [vmem:[%s1608 + $0x8] sm:$0xf]
    %v1612 = vld [vmem:[%s1608 + $0xc] sm:$0xf]
    %v1613 = vld [vmem:[%s945 + $0x5] sm:$0x1]
    %v1614 = vperm.slane %v1613, 0
    %v1619 = vunpack.c.l.b16 %v1609
    %v1620 = vunpack.c.l.b16 %v1610
    %v1621 = vunpack.c.l.b16 %v1611
    %v1622 = vunpack.c.l.b16 %v1612
    %v1623 = vpack.c.b16 %v1620, %v1619
    %v1624 = vpack.c.b16 %v1622, %v1621
    %v1628 = vsel %vm47, %v1607, 0
    %1630 = vmatpush.bf16.msra.mxu0 0
    %1631 = vmatpush.bf16.msra.mxu0 0
    %1632 = vmatpush.bf16.msra.mxu0 0
    %1633 = vmatpush.bf16.msra.mxu0 0
    %1634 = vmatpush.bf16.msra.mxu0 0
    %1635 = vmatpush.bf16.msra.mxu0 0
    %1636 = vmatpush.bf16.msra.mxu0 %v1624
    %1637 = vmatpush.bf16.msra.mxu0 %v1623
    %1638 = vmatmul.bf16.gmra.mxu0 %v1628
    %v1639 = vpop.f32.mrf.mxu0
    %v1640 = vadd.f32 %v1614, %v1639
    %v1641 = vpop.f32.mrf.mxu0
    %v1642 = vadd.f32 %v1614, %v1641
    %1643 = vdwg.mxu0
    %v1644 = vadd.f32 %v943, %v1640
    %v1645 = vadd.f32 %v944, %v1642
    %v1646 = vld [vmem:[%s945 + $0x6] sm:$0x1]
    %v1647 = vld [vmem:[%s945 + $0x7] sm:$0x1]
    %v1648 = vsel %vm47, %v1644, 0.0
    %1649 = vadd.xlane.f32.xlu0 %v1648
    %v1650 = vpop.xlane.xlu0 %1649
    %v1651 = vsel %vm47, %v1645, 0.0
    %1652 = vadd.xlane.f32.xlu0 %v1651
    %v1653 = vpop.xlane.xlu0 %1652
    %v1654 = vmul.f32 %v1650, %v60
    %v1655 = vmul.f32 %v1653, %v60
    %v1656 = vsub.f32 %v1644, %v1654
    %v1657 = vsub.f32 %v1645, %v1655
    %v1658 = vmul.f32 %v1656, %v1656
    %v1659 = vmul.f32 %v1657, %v1657
    %v1660 = vsel %vm47, %v1658, 0.0
    %1661 = vadd.xlane.f32.xlu0 %v1660
    %v1662 = vpop.xlane.xlu0 %1661
    %v1663 = vsel %vm47, %v1659, 0.0
    %1664 = vadd.xlane.f32.xlu0 %v1663
    %v1665 = vpop.xlane.xlu0 %1664
    %v1666 = vmul.f32 %v1662, %v60
    %v1667 = vmul.f32 %v1665, %v60
    %v1668 = vadd.f32 %v1666, 1e-05
    %v1669 = vadd.f32 %v1667, 1e-05
    %v1670 = vrsqrt.pop %v1668
    %v1671 = vmul.f32 %v1670, %v1668
    %v1672 = vmul.f32 %v1671, %v1670
    %v1673 = vmul.f32 0.5, %v1672
    %v1674 = vsub.f32 1.5, %v1673
    %v1675 = vmul.f32 %v1670, %v1674
    %vm1676 = vweird.f32 %v1668
    %vm1677 = vweird.f32 %v1670
    %vm1678 = vmor %vm1676, %vm1677
    %v1679 = vsel %vm1678, %v1670, %v1675
    %v1680 = vrsqrt.pop %v1669
    %v1681 = vmul.f32 %v1680, %v1669
    %v1682 = vmul.f32 %v1681, %v1680
    %v1683 = vmul.f32 0.5, %v1682
    %v1684 = vsub.f32 1.5, %v1683
    %v1685 = vmul.f32 %v1680, %v1684
    %vm1686 = vweird.f32 %v1669
    %vm1687 = vweird.f32 %v1680
    %vm1688 = vmor %vm1686, %vm1687
    %v1689 = vsel %vm1688, %v1680, %v1685
    %v1690 = vmul.f32 %v1656, %v1679
    %v1691 = vmul.f32 %v1657, %v1689
    %v1692 = vperm.slane %v1646, 0
    %v1693 = vmul.f32 %v1690, %v1692
    %v1694 = vmul.f32 %v1691, %v1692
    %v1695 = vperm.slane %v1647, 0
    %v1696 = vadd.f32 %v1693, %v1695
    %v1697 = vadd.f32 %v1694, %v1695
    %v1698 = vpack.c.bf16 %v1697, %v1696
    %s1699 = scalar_lea.vmem %s6, 16
    %v1700 = vld [vmem:[%s1699] sm:$0xf]
    %v1701 = vld [vmem:[%s1699 + $0x4] sm:$0xf]
    %v1702 = vld [vmem:[%s1699 + $0x8] sm:$0xf]
    %v1703 = vld [vmem:[%s1699 + $0xc] sm:$0xf]
    %v1704 = vld [vmem:[%s3 + $0x1] sm:$0x1]
    %v1705 = vperm.slane %v1704, 0
    %v1710 = vunpack.c.l.b16 %v1700
    %v1711 = vunpack.c.l.b16 %v1701
    %v1712 = vunpack.c.l.b16 %v1702
    %v1713 = vunpack.c.l.b16 %v1703
    %v1714 = vpack.c.b16 %v1711, %v1710
    %v1715 = vpack.c.b16 %v1713, %v1712
    %v1719 = vsel %vm47, %v1698, 0
    %1721 = vmatpush.bf16.msra.mxu0 0
    %1722 = vmatpush.bf16.msra.mxu0 0
    %1723 = vmatpush.bf16.msra.mxu0 0
    %1724 = vmatpush.bf16.msra.mxu0 0
    %1725 = vmatpush.bf16.msra.mxu0 0
    %1726 = vmatpush.bf16.msra.mxu0 0
    %1727 = vmatpush.bf16.msra.mxu0 %v1715
    %1728 = vmatpush.bf16.msra.mxu0 %v1714
    %1729 = vmatmul.bf16.gmra.mxu0 %v1719
    %v1730 = vpop.f32.mrf.mxu0
    %v1731 = vadd.f32 %v1705, %v1730
    %v1732 = vpop.f32.mrf.mxu0
    %v1733 = vadd.f32 %v1705, %v1732
    %1734 = vdwg.mxu0
    %v1735 = vmul.f32 %v1731, 0.5
    %v1736 = vmul.f32 %v1733, 0.5
    %v1737 = vmul.f32 %v1731, 0.044715
    %v1738 = vmul.f32 %v1733, 0.044715
    %v1739 = vmul.f32 %v1737, %v1731
    %v1740 = vmul.f32 %v1738, %v1733
    %v1741 = vmul.f32 %v1739, %v1731
    %v1742 = vmul.f32 %v1740, %v1733
    %v1743 = vadd.f32 %v1731, %v1741
    %v1744 = vadd.f32 %v1733, %v1742
    %v1745 = vmul.f32 %v1743, 0.7978846
    %v1746 = vmul.f32 %v1744, 0.7978846
    %v1747 = vtanh.pop %v1745
    %v1748 = vtanh.pop %v1746
    %v1749 = vadd.f32 %v1747, 1.0
    %v1750 = vadd.f32 %v1748, 1.0
    %v1751 = vmul.f32 %v1735, %v1749
    %v1752 = vmul.f32 %v1736, %v1750
    %v1753 = vpack.c.bf16 %v1752, %v1751
    %s1754 = scalar_lea.vmem %s7, 64
    %v1755 = vld [vmem:[%s1754] sm:$0xf]
    %v1756 = vld [vmem:[%s1754 + $0x4] sm:$0xf]
    %v1757 = vld [vmem:[%s1754 + $0x8] sm:$0xf]
    %v1758 = vld [vmem:[%s1754 + $0xc] sm:$0xf]
    %v1759 = vld [vmem:[%s1754 + $0x10] sm:$0xf]
    %v1760 = vld [vmem:[%s1754 + $0x14] sm:$0xf]
    %v1761 = vld [vmem:[%s1754 + $0x18] sm:$0xf]
    %v1762 = vld [vmem:[%s1754 + $0x1c] sm:$0xf]
    %v1763 = vld [vmem:[%s1754 + $0x20] sm:$0xf]
    %v1764 = vld [vmem:[%s1754 + $0x24] sm:$0xf]
    %v1765 = vld [vmem:[%s1754 + $0x28] sm:$0xf]
    %v1766 = vld [vmem:[%s1754 + $0x2c] sm:$0xf]
    %v1767 = vld [vmem:[%s1754 + $0x30] sm:$0xf]
    %v1768 = vld [vmem:[%s1754 + $0x34] sm:$0xf]
    %v1769 = vld [vmem:[%s1754 + $0x38] sm:$0xf]
    %v1770 = vld [vmem:[%s1754 + $0x3c] sm:$0xf]
    %v1787 = vunpack.c.l.b16 %v1755
    %v1788 = vunpack.c.l.b16 %v1756
    %v1789 = vunpack.c.l.b16 %v1757
    %v1790 = vunpack.c.l.b16 %v1758
    %v1791 = vunpack.c.l.b16 %v1759
    %v1792 = vunpack.c.l.b16 %v1760
    %v1793 = vunpack.c.l.b16 %v1761
    %v1794 = vunpack.c.l.b16 %v1762
    %v1795 = vunpack.c.l.b16 %v1763
    %v1796 = vunpack.c.l.b16 %v1764
    %v1797 = vunpack.c.l.b16 %v1765
    %v1798 = vunpack.c.l.b16 %v1766
    %v1799 = vunpack.c.l.b16 %v1767
    %v1800 = vunpack.c.l.b16 %v1768
    %v1801 = vunpack.c.l.b16 %v1769
    %v1802 = vunpack.c.l.b16 %v1770
    %v1803 = vpack.c.b16 %v1788, %v1787
    %v1804 = vpack.c.b16 %v1790, %v1789
    %v1805 = vpack.c.b16 %v1792, %v1791
    %v1806 = vpack.c.b16 %v1794, %v1793
    %v1807 = vpack.c.b16 %v1796, %v1795
    %v1808 = vpack.c.b16 %v1798, %v1797
    %v1809 = vpack.c.b16 %v1800, %v1799
    %v1810 = vpack.c.b16 %v1802, %v1801
    %1819 = vmatpush.bf16.msra.mxu0 %v1810
    %1820 = vmatpush.bf16.msra.mxu0 %v1809
    %1821 = vmatpush.bf16.msra.mxu0 %v1808
    %1822 = vmatpush.bf16.msra.mxu0 %v1807
    %1823 = vmatpush.bf16.msra.mxu0 %v1806
    %1824 = vmatpush.bf16.msra.mxu0 %v1805
    %1825 = vmatpush.bf16.msra.mxu0 %v1804
    %1826 = vmatpush.bf16.msra.mxu0 %v1803
    %1827 = vmatmul.bf16.gmra.mxu0 %v1753
    %v1828 = vpop.f32.mrf.mxu0
    %v1829 = vadd.f32 0.0, %v1828
    %v1830 = vpop.f32.mrf.mxu0
    %v1831 = vadd.f32 0.0, %v1830
    %1832 = vdwg.mxu0
    %v1833 = vadd.f32 %v1644, %v1829
    %v1834 = vadd.f32 %v1645, %v1831
    %v1835 = vld [vmem:[%s945 + $0x8] sm:$0x1]
    %v1836 = vperm.slane %v1835, 0
    %v1837 = vadd.f32 %v1833, %v1836
    %v1838 = vadd.f32 %v1834, %v1836
    %s1839 = scalar_lea.vmem %s2, 32
    %v1840 = vld [vmem:[%s1839] sm:$0x1]
    %v1841 = vld [vmem:[%s1839 + $0x1] sm:$0x1]
    %v1844 = vrot.slane %v1838, 7
    %vm1847 = vcmask 261127
    %v1848 = vsel %vm1847, %v1837, 0.0
    %1849 = vadd.xlane.f32.xlu0 %v1848
    %v1850 = vpop.xlane.xlu0 %1849
    %vm1851 = vcmask 253952
    %v1852 = vsel %vm1851, %v1844, 0.0
    %1853 = vadd.xlane.f32.xlu0 %v1852
    %v1854 = vpop.xlane.xlu0 %1853
    %v1855 = vmul.f32 %v1850, %v60
    %v1856 = vmul.f32 %v1854, %v60
    %v1859 = vrot.slane %v1856, 1
    %v1862 = vsub.f32 %v1837, %v1855
    %v1863 = vsub.f32 %v1838, %v1859
    %v1864 = vmul.f32 %v1862, %v1862
    %v1865 = vmul.f32 %v1863, %v1863
    %v1868 = vrot.slane %v1865, 7
    %v1871 = vsel %vm1847, %v1864, 0.0
    %1872 = vadd.xlane.f32.xlu0 %v1871
    %v1873 = vpop.xlane.xlu0 %1872
    %v1874 = vsel %vm1851, %v1868, 0.0
    %1875 = vadd.xlane.f32.xlu0 %v1874
    %v1876 = vpop.xlane.xlu0 %1875
    %v1877 = vmul.f32 %v1873, %v60
    %v1878 = vmul.f32 %v1876, %v60
    %v1879 = vadd.f32 %v1877, 1e-05
    %v1880 = vadd.f32 %v1878, 1e-05
    %v1881 = vrsqrt.pop %v1879
    %v1882 = vmul.f32 %v1881, %v1879
    %v1883 = vmul.f32 %v1882, %v1881
    %v1884 = vmul.f32 0.5, %v1883
    %v1885 = vsub.f32 1.5, %v1884
    %v1886 = vmul.f32 %v1881, %v1885
    %vm1887 = vweird.f32 %v1879
    %vm1888 = vweird.f32 %v1881
    %vm1889 = vmor %vm1887, %vm1888
    %v1890 = vsel %vm1889, %v1881, %v1886
    %v1891 = vrsqrt.pop %v1880
    %v1892 = vmul.f32 %v1891, %v1880
    %v1893 = vmul.f32 %v1892, %v1891
    %v1894 = vmul.f32 0.5, %v1893
    %v1895 = vsub.f32 1.5, %v1894
    %v1896 = vmul.f32 %v1891, %v1895
    %vm1897 = vweird.f32 %v1880
    %vm1898 = vweird.f32 %v1891
    %vm1899 = vmor %vm1897, %vm1898
    %v1900 = vsel %vm1899, %v1891, %v1896
    %v1903 = vrot.slane %v1900, 1
    %v1906 = vmul.f32 %v1862, %v1890
    %v1907 = vmul.f32 %v1863, %v1903
    %v1908 = vperm.slane %v1840, 0
    %v1909 = vmul.f32 %v1906, %v1908
    %v1910 = vmul.f32 %v1907, %v1908
    %v1911 = vperm.slane %v1841, 0
    %v1912 = vadd.f32 %v1909, %v1911
    %v1913 = vadd.f32 %v1910, %v1911
    %v1914 = vpack.c.bf16 %v1912, %v1912
    %v1915 = vpack.c.bf16 %v1913, %v1913
    %v1916 = vld [vmem:[%s8] sm:$0xf]
    %v1917 = vld [vmem:[%s8 + $0x4] sm:$0xf]
    %v1918 = vld [vmem:[%s8 + $0x8] sm:$0xf]
    %v1919 = vld [vmem:[%s8 + $0xc] sm:$0xf]
    %v1922 = vunpack.c.l.b16 %v1914
    %v1923 = vunpack.c.l.b16 %v1915
    %v1924 = vrot.slane %v1922, 7
    %v1925 = vrot.slane %v1923, 6
    %vm1926 = vcmask 1041409
    %v1927 = vsel %vm1926, %v1925, %v1924
    %v1928 = vpack.c.b16 %v1927, %v1927
    %v1933 = vunpack.c.l.b16 %v1916
    %v1934 = vunpack.c.l.b16 %v1917
    %v1935 = vunpack.c.l.b16 %v1918
    %v1936 = vunpack.c.l.b16 %v1919
    %v1937 = vpack.c.b16 %v1934, %v1933
    %v1938 = vpack.c.b16 %v1936, %v1935
    %v1942 = vsel %vm47, %v1928, 0
    %1944 = vmatpush.bf16.msra.mxu0 0
    %1945 = vmatpush.bf16.msra.mxu0 0
    %1946 = vmatpush.bf16.msra.mxu0 0
    %1947 = vmatpush.bf16.msra.mxu0 0
    %1948 = vmatpush.bf16.msra.mxu0 0
    %1949 = vmatpush.bf16.msra.mxu0 0
    %1950 = vmatpush.bf16.msra.mxu0 %v1938
    %1951 = vmatpush.bf16.msra.mxu0 %v1937
    %1952 = vmatmul.bf16.gmra.mxu0 %v1942
    %v1953 = vpop.f32.mrf.mxu0
    %v1954 = vadd.f32 0.0, %v1953
    %v1955 = vpop.f32.mrf.mxu0
    %1956 = vdwg.mxu0
    %1957 = vst [vmem:[#allocation2] sm:$0x3] %v1954
    // Predicated region
    $region38: #{_lambda_.1} parent=1 // pred_check
      _
    $region39: #{_lambda_.1} parent=1 // pred_check_branch
      %1959 = sbr.rel (0) target = $region41
    $region40: #{_lambda_.1} parent=1 // pred_region
      %1961 = vsyncadd [#allocation3], 0
      %s1963 = sshll.u32 [#allocation2], 4
      %s1964 = int_to_ptr.vmem [resolvable:$true] %s1963
      %s1965 = sshll.u32 %s9, 4
      %s1966 = int_to_ptr.hbm [resolvable:$true] %s1965
      %1968 = dma.vmem_to_hbm [thread:$0]  %s1964, 32, %s1966, [#allocation3]
    $region41: #{_lambda_.1} parent=1 // pred_fallthru
      _
    // Predicated region
    $region42: #{_lambda_.1} parent=1 // pred_check
      _
    $region43: #{_lambda_.1} parent=1 // pred_check_branch
      %1970 = sbr.rel (0) target = $region45
    $region44: #{_lambda_.1} parent=1 // pred_region
      %1972 = dma.done [#allocation3], 32
    $region45: #{_lambda_.1} parent=1 // pred_fallthru
      _
    %1973 = vsyncpa [#allocation3], 1

</llo_original>
